<compile_context>
chip_gen: v6e
topology: v6e:2x2x1
jax: 0.10.0
libtpu: 0.0.40
codegen_flags: <defaults>
</compile_context>

<pallas_src>
import jax
import jax.numpy as jnp
from jax.experimental import pallas as pl
from jax.experimental.pallas import tpu as pltpu

FEAT = 784     # 28 * 28 input / output features
HID_PAD = 128  # 48-wide hidden dims zero-padded to one full lane tile


def _ae_kernel(x_ref,
               w1, b1, w2, b2, w34, b34, w5, b5, w6, b6,
               o_ref):
    # x_ref: (bt, 784) f32; weights bf16; biases f32; output bf16.
    x = x_ref[...].astype(jnp.bfloat16)
    h = jnp.dot(x, w1[...], preferred_element_type=jnp.float32) + b1[...]
    h = jnp.maximum(h, 0.0)                                           # ReLU
    h = jnp.dot(h.astype(jnp.bfloat16), w2[...],
                preferred_element_type=jnp.float32) + b2[...]
    h = jnp.maximum(h, 0.0)                                           # ReLU
    # 48 -> 2 -> 48 bottleneck (no activation on z) folded into one matmul,
    # zero-padded to 128x128 lanes.
    h = jnp.dot(h.astype(jnp.bfloat16), w34[...],
                preferred_element_type=jnp.float32) + b34[...]
    h = jnp.maximum(h, 0.0)                                           # ReLU
    h = jnp.dot(h.astype(jnp.bfloat16), w5[...],
                preferred_element_type=jnp.float32) + b5[...]
    h = jnp.maximum(h, 0.0)                                           # ReLU
    h = jnp.dot(h.astype(jnp.bfloat16), w6[...],
                preferred_element_type=jnp.float32) + b6[...]
    # sigmoid(h) == 0.5 * (tanh(h/2) + 1): single EUP op instead of exp+div.
    o_ref[...] = (0.5 * (jnp.tanh(0.5 * h) + 1.0)).astype(o_ref.dtype)


def _round_up(a, m):
    return (a + m - 1) // m * m


def _choose_bt(B, batch_tile):
    """Batch tile: multiple of 16 (bf16 sublane packing), no larger than the
    padded batch; for large batches keep >= 2 grid steps (v7x megacore)."""
    b_pad = _round_up(max(B, 1), 16)
    bt = min(max(16, _round_up(batch_tile, 16)), b_pad)
    if b_pad >= 32:
        bt = min(bt, _round_up(b_pad // 2, 16))
    return max(16, (bt // 16) * 16)


def prepare_kernel_params(params):
    """f32 torch-style params -> kernel operands: bf16 weights, f32 biases,
    bottleneck folded, 48-wide hidden dims zero-padded to 128 lanes."""
    (w1, b1), (w2, b2), (w3, b3), (w4, b4), (w5, b5), (w6, b6) = params
    # Fold z = h@w3 + b3 ; h = relu(z@w4 + b4)  into  relu(h@W34 + b34).
    w34 = w3 @ w4                                     # (48, 48)
    b34 = b3 @ w4 + b4                                # (1, 48)
    # Zero-pad the 48-wide hidden dims to 128 (exact: zero bias -> relu -> 0).
    w2p = jnp.pad(w2, ((0, 0), (0, HID_PAD - 48)))    # (256, 128)
    b2p = jnp.pad(b2, ((0, 0), (0, HID_PAD - 48)))    # (1, 128)
    w34p = jnp.pad(w34, ((0, HID_PAD - 48), (0, HID_PAD - 48)))  # (128, 128)
    b34p = jnp.pad(b34, ((0, 0), (0, HID_PAD - 48)))  # (1, 128)
    w5p = jnp.pad(w5, ((0, HID_PAD - 48), (0, 0)))    # (128, 256)
    bf16 = lambda a: a.astype(jnp.bfloat16)
    f32 = lambda a: a.astype(jnp.float32)
    return (bf16(w1), f32(b1), bf16(w2p), f32(b2p), bf16(w34p), f32(b34p),
            bf16(w5p), f32(b5), bf16(w6), f32(b6))


def ae_forward(x_nchw, params, *, batch_tile=1024, out_dtype=jnp.bfloat16):
    """x_nchw: (B, 1, 28, 28) float32. Returns (B, 784) `out_dtype`."""
    B = x_nchw.shape[0]
    x = x_nchw.reshape(B, -1).astype(jnp.float32)   # torch.nn.Flatten semantics
    assert x.shape[1] == FEAT

    bt = _choose_bt(B, batch_tile)
    Bp = _round_up(B, bt)
    if Bp != B:
        x = jnp.pad(x, ((0, Bp - B), (0, 0)))       # pad batch rows only

    weight_args = prepare_kernel_params(params)

    def wspec(arr):
        # Full-array block, constant index_map: fetched once, kept resident.
        return pl.BlockSpec(arr.shape, lambda i: (0,) * arr.ndim)

    out = pl.pallas_call(
        _ae_kernel,
        out_shape=jax.ShapeDtypeStruct((Bp, FEAT), out_dtype),
        grid_spec=pltpu.PrefetchScalarGridSpec(
            num_scalar_prefetch=0,
            grid=(Bp // bt,),
            in_specs=[pl.BlockSpec((bt, FEAT), lambda i: (i, 0))]
                     + [wspec(a) for a in weight_args],
            out_specs=pl.BlockSpec((bt, FEAT), lambda i: (i, 0)),
        ),
        compiler_params=pltpu.CompilerParams(
            dimension_semantics=("parallel",),
            vmem_limit_bytes=32 * 1024 * 1024,
        ),
    )(x, *weight_args)

    return out[:B] if Bp != B else out


def init_params(key):
    """PyTorch-style uniform(+-1/sqrt(fan_in)) init, weights stored transposed
    as (in_features, out_features); biases stored as (1, out_features)."""
    dims = [(784, 256), (256, 48), (48, 2),     # encoder
            (2, 48), (48, 256), (256, 784)]     # decoder
    params = []
    for (fan_in, fan_out) in dims:
        key, kw, kb = jax.random.split(key, 3)
        bound = 1.0 / (fan_in ** 0.5)
        w = jax.random.uniform(kw, (fan_in, fan_out), jnp.float32, -bound, bound)
        b = jax.random.uniform(kb, (1, fan_out), jnp.float32, -bound, bound)
        params.append((w, b))
    return params


def _reference(x_nchw, params):
    """Faithful (unfused, f32) forward of the PyTorch module."""
    h = x_nchw.reshape(x_nchw.shape[0], -1)
    (w1, b1), (w2, b2), (w3, b3), (w4, b4), (w5, b5), (w6, b6) = params
    h = jax.nn.relu(h @ w1 + b1)
    h = jax.nn.relu(h @ w2 + b2)
    z = h @ w3 + b3
    h = jax.nn.relu(z @ w4 + b4)
    h = jax.nn.relu(h @ w5 + b5)
    return jax.nn.sigmoid(h @ w6 + b6)


if __name__ == "__main__":
    key = jax.random.PRNGKey(0)
    kx, kp = jax.random.split(key)

    B = 4
    x = jax.random.normal(kx, (B, 1, 28, 28), jnp.float32)   # MNIST-like NCHW
    params = init_params(kp)

    out = ae_forward(x, params)
    out = jax.block_until_ready(out)

    ref = _reference(x, params)
    assert out.shape == (B, 784)
    # bf16 matmuls/output + folded bottleneck are mathematically equivalent
    # but not bit-identical to the f32 reference; sigmoid output error ~1e-3.
    assert jnp.allclose(out.astype(jnp.float32), ref, atol=3e-2, rtol=0.0), \
        "mismatch vs reference"

    print("KERNEL_OK")
</pallas_src>

<mosaic_0001>
module attributes {stable_mosaic.version = 11 : i64} {
  func.func @_ae_kernel(%arg0: i32, %arg1: memref<16x784xf32, #tpu.memory_space<vmem>>, %arg2: memref<784x256xbf16, #tpu.memory_space<vmem>>, %arg3: memref<1x256xf32, #tpu.memory_space<vmem>>, %arg4: memref<256x128xbf16, #tpu.memory_space<vmem>>, %arg5: memref<1x128xf32, #tpu.memory_space<vmem>>, %arg6: memref<128x128xbf16, #tpu.memory_space<vmem>>, %arg7: memref<1x128xf32, #tpu.memory_space<vmem>>, %arg8: memref<128x256xbf16, #tpu.memory_space<vmem>>, %arg9: memref<1x256xf32, #tpu.memory_space<vmem>>, %arg10: memref<256x784xbf16, #tpu.memory_space<vmem>>, %arg11: memref<1x784xf32, #tpu.memory_space<vmem>>, %arg12: memref<16x784xbf16, #tpu.memory_space<vmem>>) attributes {dimension_semantics = [#tpu.dimension_semantics<parallel>], iteration_bounds = array<i64: 1>, scalar_prefetch = 0 : i64, scratch_operands = 0 : i64, tpu.core_type = #tpu.core_type<tc>, window_params = [{transform_indices = @transform_0, window_bounds = array<i64: 16, 784>}, {pipeline_mode = #tpu.pipeline_mode<synchronous>, transform_indices = @transform_1, window_bounds = array<i64: 784, 256>}, {pipeline_mode = #tpu.pipeline_mode<synchronous>, transform_indices = @transform_2, window_bounds = array<i64: 1, 256>}, {pipeline_mode = #tpu.pipeline_mode<synchronous>, transform_indices = @transform_3, window_bounds = array<i64: 256, 128>}, {pipeline_mode = #tpu.pipeline_mode<synchronous>, transform_indices = @transform_4, window_bounds = array<i64: 1, 128>}, {pipeline_mode = #tpu.pipeline_mode<synchronous>, transform_indices = @transform_5, window_bounds = array<i64: 128, 128>}, {pipeline_mode = #tpu.pipeline_mode<synchronous>, transform_indices = @transform_6, window_bounds = array<i64: 1, 128>}, {pipeline_mode = #tpu.pipeline_mode<synchronous>, transform_indices = @transform_7, window_bounds = array<i64: 128, 256>}, {pipeline_mode = #tpu.pipeline_mode<synchronous>, transform_indices = @transform_8, window_bounds = array<i64: 1, 256>}, {pipeline_mode = #tpu.pipeline_mode<synchronous>, transform_indices = @transform_9, window_bounds = array<i64: 256, 784>}, {pipeline_mode = #tpu.pipeline_mode<synchronous>, transform_indices = @transform_10, window_bounds = array<i64: 1, 784>}, {transform_indices = @transform_11, window_bounds = array<i64: 16, 784>}]} {
    %c0 = arith.constant 0 : index
    %c0_0 = arith.constant 0 : index
    %0 = vector.load %arg1[%c0, %c0_0] : memref<16x784xf32, #tpu.memory_space<vmem>>, vector<16x784xf32>
    %1 = arith.truncf %0 : vector<16x784xf32> to vector<16x784xbf16>
    %c0_1 = arith.constant 0 : index
    %c0_2 = arith.constant 0 : index
    %2 = vector.load %arg2[%c0_1, %c0_2] : memref<784x256xbf16, #tpu.memory_space<vmem>>, vector<784x256xbf16>
    %cst = arith.constant dense<0.000000e+00> : vector<16x256xf32>
    %3 = tpu.matmul %1, %2, %cst {dimension_numbers = #tpu.dot_dimension_numbers<[1], [0], [0], [1], [0, 0, 1, 1], [], []>} : vector<16x784xbf16>, vector<784x256xbf16>, vector<16x256xf32> -> vector<16x256xf32>
    %c0_3 = arith.constant 0 : index
    %c0_4 = arith.constant 0 : index
    %4 = vector.load %arg3[%c0_3, %c0_4] : memref<1x256xf32, #tpu.memory_space<vmem>>, vector<1x256xf32>
    %5 = vector.broadcast %4 : vector<1x256xf32> to vector<16x256xf32>
    %6 = arith.addf %3, %5 : vector<16x256xf32>
    %cst_5 = arith.constant 0.000000e+00 : f32
    %7 = vector.broadcast %cst_5 : f32 to vector<16x256xf32>
    %8 = arith.maximumf %6, %7 : vector<16x256xf32>
    %9 = arith.truncf %8 : vector<16x256xf32> to vector<16x256xbf16>
    %c0_6 = arith.constant 0 : index
    %c0_7 = arith.constant 0 : index
    %10 = vector.load %arg4[%c0_6, %c0_7] : memref<256x128xbf16, #tpu.memory_space<vmem>>, vector<256x128xbf16>
    %cst_8 = arith.constant dense<0.000000e+00> : vector<16x128xf32>
    %11 = tpu.matmul %9, %10, %cst_8 {dimension_numbers = #tpu.dot_dimension_numbers<[1], [0], [0], [1], [0, 0, 1, 1], [], []>} : vector<16x256xbf16>, vector<256x128xbf16>, vector<16x128xf32> -> vector<16x128xf32>
    %c0_9 = arith.constant 0 : index
    %c0_10 = arith.constant 0 : index
    %12 = vector.load %arg5[%c0_9, %c0_10] : memref<1x128xf32, #tpu.memory_space<vmem>>, vector<1x128xf32>
    %13 = vector.broadcast %12 : vector<1x128xf32> to vector<16x128xf32>
    %14 = arith.addf %11, %13 : vector<16x128xf32>
    %cst_11 = arith.constant 0.000000e+00 : f32
    %15 = vector.broadcast %cst_11 : f32 to vector<16x128xf32>
    %16 = arith.maximumf %14, %15 : vector<16x128xf32>
    %17 = arith.truncf %16 : vector<16x128xf32> to vector<16x128xbf16>
    %c0_12 = arith.constant 0 : index
    %c0_13 = arith.constant 0 : index
    %18 = vector.load %arg6[%c0_12, %c0_13] : memref<128x128xbf16, #tpu.memory_space<vmem>>, vector<128x128xbf16>
    %cst_14 = arith.constant dense<0.000000e+00> : vector<16x128xf32>
    %19 = tpu.matmul %17, %18, %cst_14 {dimension_numbers = #tpu.dot_dimension_numbers<[1], [0], [0], [1], [0, 0, 1, 1], [], []>} : vector<16x128xbf16>, vector<128x128xbf16>, vector<16x128xf32> -> vector<16x128xf32>
    %c0_15 = arith.constant 0 : index
    %c0_16 = arith.constant 0 : index
    %20 = vector.load %arg7[%c0_15, %c0_16] : memref<1x128xf32, #tpu.memory_space<vmem>>, vector<1x128xf32>
    %21 = vector.broadcast %20 : vector<1x128xf32> to vector<16x128xf32>
    %22 = arith.addf %19, %21 : vector<16x128xf32>
    %cst_17 = arith.constant 0.000000e+00 : f32
    %23 = vector.broadcast %cst_17 : f32 to vector<16x128xf32>
    %24 = arith.maximumf %22, %23 : vector<16x128xf32>
    %25 = arith.truncf %24 : vector<16x128xf32> to vector<16x128xbf16>
    %c0_18 = arith.constant 0 : index
    %c0_19 = arith.constant 0 : index
    %26 = vector.load %arg8[%c0_18, %c0_19] : memref<128x256xbf16, #tpu.memory_space<vmem>>, vector<128x256xbf16>
    %cst_20 = arith.constant dense<0.000000e+00> : vector<16x256xf32>
    %27 = tpu.matmul %25, %26, %cst_20 {dimension_numbers = #tpu.dot_dimension_numbers<[1], [0], [0], [1], [0, 0, 1, 1], [], []>} : vector<16x128xbf16>, vector<128x256xbf16>, vector<16x256xf32> -> vector<16x256xf32>
    %c0_21 = arith.constant 0 : index
    %c0_22 = arith.constant 0 : index
    %28 = vector.load %arg9[%c0_21, %c0_22] : memref<1x256xf32, #tpu.memory_space<vmem>>, vector<1x256xf32>
    %29 = vector.broadcast %28 : vector<1x256xf32> to vector<16x256xf32>
    %30 = arith.addf %27, %29 : vector<16x256xf32>
    %cst_23 = arith.constant 0.000000e+00 : f32
    %31 = vector.broadcast %cst_23 : f32 to vector<16x256xf32>
    %32 = arith.maximumf %30, %31 : vector<16x256xf32>
    %33 = arith.truncf %32 : vector<16x256xf32> to vector<16x256xbf16>
    %c0_24 = arith.constant 0 : index
    %c0_25 = arith.constant 0 : index
    %34 = vector.load %arg10[%c0_24, %c0_25] : memref<256x784xbf16, #tpu.memory_space<vmem>>, vector<256x784xbf16>
    %cst_26 = arith.constant dense<0.000000e+00> : vector<16x784xf32>
    %35 = tpu.matmul %33, %34, %cst_26 {dimension_numbers = #tpu.dot_dimension_numbers<[1], [0], [0], [1], [0, 0, 1, 1], [], []>} : vector<16x256xbf16>, vector<256x784xbf16>, vector<16x784xf32> -> vector<16x784xf32>
    %c0_27 = arith.constant 0 : index
    %c0_28 = arith.constant 0 : index
    %36 = vector.load %arg11[%c0_27, %c0_28] : memref<1x784xf32, #tpu.memory_space<vmem>>, vector<1x784xf32>
    %37 = vector.broadcast %36 : vector<1x784xf32> to vector<16x784xf32>
    %38 = arith.addf %35, %37 : vector<16x784xf32>
    %cst_29 = arith.constant 5.000000e-01 : f32
    %39 = vector.broadcast %cst_29 : f32 to vector<16x784xf32>
    %40 = arith.mulf %39, %38 : vector<16x784xf32>
    %41 = math.tanh %40 : vector<16x784xf32>
    %cst_30 = arith.constant 1.000000e+00 : f32
    %42 = vector.broadcast %cst_30 : f32 to vector<16x784xf32>
    %43 = arith.addf %41, %42 : vector<16x784xf32>
    %cst_31 = arith.constant 5.000000e-01 : f32
    %44 = vector.broadcast %cst_31 : f32 to vector<16x784xf32>
    %45 = arith.mulf %44, %43 : vector<16x784xf32>
    %46 = arith.truncf %45 : vector<16x784xf32> to vector<16x784xbf16>
    %c0_32 = arith.constant 0 : index
    %c0_33 = arith.constant 0 : index
    %47 = vector.load %arg12[%c0_32, %c0_33] : memref<16x784xbf16, #tpu.memory_space<vmem>>, vector<16x784xbf16>
    tpu.vector_store %arg12[%c0_32, %c0_33], %46 {strides = array<i32>} : memref<16x784xbf16, #tpu.memory_space<vmem>>, vector<16x784xbf16>,
    return
  }
  func.func @transform_0(%arg0: i32) -> (i32, i32) {
    %c0_i32 = arith.constant 0 : i32
    %c0_i32_0 = arith.constant 0 : i32
    return %arg0, %c0_i32 : i32, i32
  }
  func.func @transform_1(%arg0: i32) -> (i32, i32) {
    %c0_i32 = arith.constant 0 : i32
    %c0_i32_0 = arith.constant 0 : i32
    %c0_i32_1 = arith.constant 0 : i32
    return %c0_i32, %c0_i32_0 : i32, i32
  }
  func.func @transform_2(%arg0: i32) -> (i32, i32) {
    %c0_i32 = arith.constant 0 : i32
    %c0_i32_0 = arith.constant 0 : i32
    %c0_i32_1 = arith.constant 0 : i32
    return %c0_i32, %c0_i32_0 : i32, i32
  }
  func.func @transform_3(%arg0: i32) -> (i32, i32) {
    %c0_i32 = arith.constant 0 : i32
    %c0_i32_0 = arith.constant 0 : i32
    %c0_i32_1 = arith.constant 0 : i32
    return %c0_i32, %c0_i32_0 : i32, i32
  }
  func.func @transform_4(%arg0: i32) -> (i32, i32) {
    %c0_i32 = arith.constant 0 : i32
    %c0_i32_0 = arith.constant 0 : i32
    %c0_i32_1 = arith.constant 0 : i32
    return %c0_i32, %c0_i32_0 : i32, i32
  }
  func.func @transform_5(%arg0: i32) -> (i32, i32) {
    %c0_i32 = arith.constant 0 : i32
    %c0_i32_0 = arith.constant 0 : i32
    %c0_i32_1 = arith.constant 0 : i32
    return %c0_i32, %c0_i32_0 : i32, i32
  }
  func.func @transform_6(%arg0: i32) -> (i32, i32) {
    %c0_i32 = arith.constant 0 : i32
    %c0_i32_0 = arith.constant 0 : i32
    %c0_i32_1 = arith.constant 0 : i32
    return %c0_i32, %c0_i32_0 : i32, i32
  }
  func.func @transform_7(%arg0: i32) -> (i32, i32) {
    %c0_i32 = arith.constant 0 : i32
    %c0_i32_0 = arith.constant 0 : i32
    %c0_i32_1 = arith.constant 0 : i32
    return %c0_i32, %c0_i32_0 : i32, i32
  }
  func.func @transform_8(%arg0: i32) -> (i32, i32) {
    %c0_i32 = arith.constant 0 : i32
    %c0_i32_0 = arith.constant 0 : i32
    %c0_i32_1 = arith.constant 0 : i32
    return %c0_i32, %c0_i32_0 : i32, i32
  }
  func.func @transform_9(%arg0: i32) -> (i32, i32) {
    %c0_i32 = arith.constant 0 : i32
    %c0_i32_0 = arith.constant 0 : i32
    %c0_i32_1 = arith.constant 0 : i32
    return %c0_i32, %c0_i32_0 : i32, i32
  }
  func.func @transform_10(%arg0: i32) -> (i32, i32) {
    %c0_i32 = arith.constant 0 : i32
    %c0_i32_0 = arith.constant 0 : i32
    %c0_i32_1 = arith.constant 0 : i32
    return %c0_i32, %c0_i32_0 : i32, i32
  }
  func.func @transform_11(%arg0: i32) -> (i32, i32) {
    %c0_i32 = arith.constant 0 : i32
    %c0_i32_0 = arith.constant 0 : i32
    return %arg0, %c0_i32 : i32, i32
  }
}

</mosaic_0001>

<llo_original>
// kernel: tpu_custom_call.1
$region0: #{tpu_custom_call.1}
  #allocation0 [shape = 'u32[]', space=smem, size = 0x4, offset = 0x4, fixed_abs, tag = 'smem constant byte address 0x4 - core index']
  #allocation1 [shape = 'u32[144,128]{1,0:T(1,128)}', space=vmem, size = 0x12000, scoped, tag = 'internal scratch']
  %s0 = inlined_call_operand.vmem [shape: f32[16,784], index: 0, kind: input, shape index: {}]
  %s1 = inlined_call_operand.vmem [shape: bf16[784,256], index: 1, kind: input, shape index: {}]
  %s2 = inlined_call_operand.vmem [shape: f32[1,256], index: 2, kind: input, shape index: {}]
  %s3 = inlined_call_operand.vmem [shape: bf16[256,128], index: 3, kind: input, shape index: {}]
  %s4 = inlined_call_operand.vmem [shape: f32[1,128], index: 4, kind: input, shape index: {}]
  %s5 = inlined_call_operand.vmem [shape: bf16[128,128], index: 5, kind: input, shape index: {}]
  %s6 = inlined_call_operand.vmem [shape: f32[1,128], index: 6, kind: input, shape index: {}]
  %s7 = inlined_call_operand.vmem [shape: bf16[128,256], index: 7, kind: input, shape index: {}]
  %s8 = inlined_call_operand.vmem [shape: f32[1,256], index: 8, kind: input, shape index: {}]
  %s9 = inlined_call_operand.vmem [shape: bf16[256,784], index: 9, kind: input, shape index: {}]
  %s10 = inlined_call_operand.vmem [shape: f32[1,784], index: 10, kind: input, shape index: {}]
  %s11 = inlined_call_operand.hbm [shape: bf16[16,784], index: 11, kind: output, shape index: {}]
  %s12 = sld [smem:[#allocation0]]
  $region54: #{tpu_custom_call.1} parent=0
    _
  %s14 = ssub.s32 1, %s12
  %s15 = scalar_select 0, %s14, %s12
  $region1: #{tpu_custom_call.1} parent=0
    #allocation2 [shape = 'u8[28672]{0}', space=vmem, size = 0x7000, scoped, tag = 'output window, operand 0, single buffered']
    #allocation3 [shape = 's32[1]{0}', space=sflag, size = 0x4, scoped, tag = 'scoped memory for tpu_custom_call.1']
    %16 = vsyncpa [#allocation3], 0
    // Predicated region
    $region2: #{tpu_custom_call.1} parent=1 // pred_check
      _
    $region3: #{tpu_custom_call.1} parent=1 // pred_check_branch
      %18 = sbr.rel (0) target = $region5
    $region4: #{tpu_custom_call.1} parent=1 // pred_region
      _
    $region5: #{tpu_custom_call.1} parent=1 // pred_fallthru
      _
    // Predicated region
    $region6: #{tpu_custom_call.1} parent=1 // pred_check
      _
    $region7: #{tpu_custom_call.1} parent=1 // pred_check_branch
      %20 = sbr.rel (0) target = $region9
    $region8: #{tpu_custom_call.1} parent=1 // pred_region
      _
    $region9: #{tpu_custom_call.1} parent=1 // pred_fallthru
      _
    // Predicated region
    $region10: #{tpu_custom_call.1} parent=1 // pred_check
      _
    $region11: #{tpu_custom_call.1} parent=1 // pred_check_branch
      %22 = sbr.rel (0) target = $region13
    $region12: #{tpu_custom_call.1} parent=1 // pred_region
      _
    $region13: #{tpu_custom_call.1} parent=1 // pred_fallthru
      _
    // Predicated region
    $region14: #{tpu_custom_call.1} parent=1 // pred_check
      _
    $region15: #{tpu_custom_call.1} parent=1 // pred_check_branch
      %24 = sbr.rel (0) target = $region17
    $region16: #{tpu_custom_call.1} parent=1 // pred_region
      _
    $region17: #{tpu_custom_call.1} parent=1 // pred_fallthru
      _
    // Predicated region
    $region18: #{tpu_custom_call.1} parent=1 // pred_check
      _
    $region19: #{tpu_custom_call.1} parent=1 // pred_check_branch
      %26 = sbr.rel (0) target = $region21
    $region20: #{tpu_custom_call.1} parent=1 // pred_region
      _
    $region21: #{tpu_custom_call.1} parent=1 // pred_fallthru
      _
    // Predicated region
    $region22: #{tpu_custom_call.1} parent=1 // pred_check
      _
    $region23: #{tpu_custom_call.1} parent=1 // pred_check_branch
      %28 = sbr.rel (0) target = $region25
    $region24: #{tpu_custom_call.1} parent=1 // pred_region
      _
    $region25: #{tpu_custom_call.1} parent=1 // pred_fallthru
      _
    // Predicated region
    $region26: #{tpu_custom_call.1} parent=1 // pred_check
      _
    $region27: #{tpu_custom_call.1} parent=1 // pred_check_branch
      %30 = sbr.rel (0) target = $region29
    $region28: #{tpu_custom_call.1} parent=1 // pred_region
      _
    $region29: #{tpu_custom_call.1} parent=1 // pred_fallthru
      _
    // Predicated region
    $region30: #{tpu_custom_call.1} parent=1 // pred_check
      _
    $region31: #{tpu_custom_call.1} parent=1 // pred_check_branch
      %32 = sbr.rel (0) target = $region33
    $region32: #{tpu_custom_call.1} parent=1 // pred_region
      _
    $region33: #{tpu_custom_call.1} parent=1 // pred_fallthru
      _
    // Predicated region
    $region34: #{tpu_custom_call.1} parent=1 // pred_check
      _
    $region35: #{tpu_custom_call.1} parent=1 // pred_check_branch
      %34 = sbr.rel (0) target = $region37
    $region36: #{tpu_custom_call.1} parent=1 // pred_region
      _
    $region37: #{tpu_custom_call.1} parent=1 // pred_fallthru
      _
    // Predicated region
    $region38: #{tpu_custom_call.1} parent=1 // pred_check
      _
    $region39: #{tpu_custom_call.1} parent=1 // pred_check_branch
      %36 = sbr.rel (0) target = $region41
    $region40: #{tpu_custom_call.1} parent=1 // pred_region
      _
    $region41: #{tpu_custom_call.1} parent=1 // pred_fallthru
      _
    // Predicated region
    $region42: #{tpu_custom_call.1} parent=1 // pred_check
      _
    $region43: #{tpu_custom_call.1} parent=1 // pred_check_branch
      %38 = sbr.rel (0) target = $region45
    $region44: #{tpu_custom_call.1} parent=1 // pred_region
      _
    $region45: #{tpu_custom_call.1} parent=1 // pred_fallthru
      _
    %v40 = vld [vmem:[%s0] sm:$0xff]
    %v41 = vld [vmem:[%s0 + $0x8] sm:$0xff]
    %v42 = vld [vmem:[%s0 + $0x10] sm:$0xff]
    %v43 = vld [vmem:[%s0 + $0x18] sm:$0xff]
    %v44 = vld [vmem:[%s0 + $0x20] sm:$0xff]
    %v45 = vld [vmem:[%s0 + $0x28] sm:$0xff]
    %v46 = vld [vmem:[%s0 + $0x30] sm:$0xff]
    %v47 = vld [vmem:[%s0 + $0x38] sm:$0xff]
    %v48 = vld [vmem:[%s0 + $0x40] sm:$0xff]
    %v49 = vld [vmem:[%s0 + $0x48] sm:$0xff]
    %v50 = vld [vmem:[%s0 + $0x50] sm:$0xff]
    %v51 = vld [vmem:[%s0 + $0x58] sm:$0xff]
    %v52 = vld [vmem:[%s0 + $0x60] sm:$0xff]
    %v53 = vld [vmem:[%s0 + $0x68] sm:$0xff]
    %v54 = vpack.c.bf16 %v47, %v40
    %v55 = vpack.c.bf16 %v48, %v41
    %v56 = vpack.c.bf16 %v49, %v42
    %v57 = vpack.c.bf16 %v50, %v43
    %v58 = vpack.c.bf16 %v51, %v44
    %v59 = vpack.c.bf16 %v52, %v45
    %v60 = vpack.c.bf16 %v53, %v46
    %v61 = vld [vmem:[%s1] sm:$0xff]
    %v62 = vld [vmem:[%s1 + $0x8] sm:$0xff]
    %v63 = vld [vmem:[%s1 + $0x10] sm:$0xff]
    %v64 = vld [vmem:[%s1 + $0x18] sm:$0xff]
    %v65 = vld [vmem:[%s1 + $0x20] sm:$0xff]
    %v66 = vld [vmem:[%s1 + $0x28] sm:$0xff]
    %v67 = vld [vmem:[%s1 + $0x30] sm:$0xff]
    %v68 = vld [vmem:[%s1 + $0x38] sm:$0xff]
    %v69 = vld [vmem:[%s1 + $0x40] sm:$0xff]
    %v70 = vld [vmem:[%s1 + $0x48] sm:$0xff]
    %v71 = vld [vmem:[%s1 + $0x50] sm:$0xff]
    %v72 = vld [vmem:[%s1 + $0x58] sm:$0xff]
    %v73 = vld [vmem:[%s1 + $0x60] sm:$0xff]
    %v74 = vld [vmem:[%s1 + $0x68] sm:$0xff]
    %v75 = vld [vmem:[%s1 + $0x70] sm:$0xff]
    %v76 = vld [vmem:[%s1 + $0x78] sm:$0xff]
    %v77 = vld [vmem:[%s1 + $0x80] sm:$0xff]
    %v78 = vld [vmem:[%s1 + $0x88] sm:$0xff]
    %v79 = vld [vmem:[%s1 + $0x90] sm:$0xff]
    %v80 = vld [vmem:[%s1 + $0x98] sm:$0xff]
    %v81 = vld [vmem:[%s1 + $0xa0] sm:$0xff]
    %v82 = vld [vmem:[%s1 + $0xa8] sm:$0xff]
    %v83 = vld [vmem:[%s1 + $0xb0] sm:$0xff]
    %v84 = vld [vmem:[%s1 + $0xb8] sm:$0xff]
    %v85 = vld [vmem:[%s1 + $0xc0] sm:$0xff]
    %v86 = vld [vmem:[%s1 + $0xc8] sm:$0xff]
    %v87 = vld [vmem:[%s1 + $0xd0] sm:$0xff]
    %v88 = vld [vmem:[%s1 + $0xd8] sm:$0xff]
    %v89 = vld [vmem:[%s1 + $0xe0] sm:$0xff]
    %v90 = vld [vmem:[%s1 + $0xe8] sm:$0xff]
    %v91 = vld [vmem:[%s1 + $0xf0] sm:$0xff]
    %v92 = vld [vmem:[%s1 + $0xf8] sm:$0xff]
    %v93 = vld [vmem:[%s1 + $0x100] sm:$0xff]
    %v94 = vld [vmem:[%s1 + $0x108] sm:$0xff]
    %v95 = vld [vmem:[%s1 + $0x110] sm:$0xff]
    %v96 = vld [vmem:[%s1 + $0x118] sm:$0xff]
    %v97 = vld [vmem:[%s1 + $0x120] sm:$0xff]
    %v98 = vld [vmem:[%s1 + $0x128] sm:$0xff]
    %v99 = vld [vmem:[%s1 + $0x130] sm:$0xff]
    %v100 = vld [vmem:[%s1 + $0x138] sm:$0xff]
    %v101 = vld [vmem:[%s1 + $0x140] sm:$0xff]
    %v102 = vld [vmem:[%s1 + $0x148] sm:$0xff]
    %v103 = vld [vmem:[%s1 + $0x150] sm:$0xff]
    %v104 = vld [vmem:[%s1 + $0x158] sm:$0xff]
    %v105 = vld [vmem:[%s1 + $0x160] sm:$0xff]
    %v106 = vld [vmem:[%s1 + $0x168] sm:$0xff]
    %v107 = vld [vmem:[%s1 + $0x170] sm:$0xff]
    %v108 = vld [vmem:[%s1 + $0x178] sm:$0xff]
    %v109 = vld [vmem:[%s1 + $0x180] sm:$0xff]
    %v110 = vld [vmem:[%s1 + $0x188] sm:$0xff]
    %v111 = vld [vmem:[%s1 + $0x190] sm:$0xff]
    %v112 = vld [vmem:[%s1 + $0x198] sm:$0xff]
    %v113 = vld [vmem:[%s1 + $0x1a0] sm:$0xff]
    %v114 = vld [vmem:[%s1 + $0x1a8] sm:$0xff]
    %v115 = vld [vmem:[%s1 + $0x1b0] sm:$0xff]
    %v116 = vld [vmem:[%s1 + $0x1b8] sm:$0xff]
    %v117 = vld [vmem:[%s1 + $0x1c0] sm:$0xff]
    %v118 = vld [vmem:[%s1 + $0x1c8] sm:$0xff]
    %v119 = vld [vmem:[%s1 + $0x1d0] sm:$0xff]
    %v120 = vld [vmem:[%s1 + $0x1d8] sm:$0xff]
    %v121 = vld [vmem:[%s1 + $0x1e0] sm:$0xff]
    %v122 = vld [vmem:[%s1 + $0x1e8] sm:$0xff]
    %v123 = vld [vmem:[%s1 + $0x1f0] sm:$0xff]
    %v124 = vld [vmem:[%s1 + $0x1f8] sm:$0xff]
    %v125 = vld [vmem:[%s1 + $0x200] sm:$0xff]
    %v126 = vld [vmem:[%s1 + $0x208] sm:$0xff]
    %v127 = vld [vmem:[%s1 + $0x210] sm:$0xff]
    %v128 = vld [vmem:[%s1 + $0x218] sm:$0xff]
    %v129 = vld [vmem:[%s1 + $0x220] sm:$0xff]
    %v130 = vld [vmem:[%s1 + $0x228] sm:$0xff]
    %v131 = vld [vmem:[%s1 + $0x230] sm:$0xff]
    %v132 = vld [vmem:[%s1 + $0x238] sm:$0xff]
    %v133 = vld [vmem:[%s1 + $0x240] sm:$0xff]
    %v134 = vld [vmem:[%s1 + $0x248] sm:$0xff]
    %v135 = vld [vmem:[%s1 + $0x250] sm:$0xff]
    %v136 = vld [vmem:[%s1 + $0x258] sm:$0xff]
    %v137 = vld [vmem:[%s1 + $0x260] sm:$0xff]
    %v138 = vld [vmem:[%s1 + $0x268] sm:$0xff]
    %v139 = vld [vmem:[%s1 + $0x270] sm:$0xff]
    %v140 = vld [vmem:[%s1 + $0x278] sm:$0xff]
    %v141 = vld [vmem:[%s1 + $0x280] sm:$0xff]
    %v142 = vld [vmem:[%s1 + $0x288] sm:$0xff]
    %v143 = vld [vmem:[%s1 + $0x290] sm:$0xff]
    %v144 = vld [vmem:[%s1 + $0x298] sm:$0xff]
    %v145 = vld [vmem:[%s1 + $0x2a0] sm:$0xff]
    %v146 = vld [vmem:[%s1 + $0x2a8] sm:$0xff]
    %v147 = vld [vmem:[%s1 + $0x2b0] sm:$0xff]
    %v148 = vld [vmem:[%s1 + $0x2b8] sm:$0xff]
    %v149 = vld [vmem:[%s1 + $0x2c0] sm:$0xff]
    %v150 = vld [vmem:[%s1 + $0x2c8] sm:$0xff]
    %v151 = vld [vmem:[%s1 + $0x2d0] sm:$0xff]
    %v152 = vld [vmem:[%s1 + $0x2d8] sm:$0xff]
    %v153 = vld [vmem:[%s1 + $0x2e0] sm:$0xff]
    %v154 = vld [vmem:[%s1 + $0x2e8] sm:$0xff]
    %v155 = vld [vmem:[%s1 + $0x2f0] sm:$0xff]
    %v156 = vld [vmem:[%s1 + $0x2f8] sm:$0xff]
    %v157 = vld [vmem:[%s1 + $0x300] sm:$0xff]
    %v158 = vld [vmem:[%s1 + $0x308] sm:$0xff]
    %v159 = vld [vmem:[%s2] sm:$0x3]
    %v161 = vlaneseq
    %v162 = vshrl.u32 %v161, 7
    %v163 = vsub.s32 0, %v162
    %v164 = vrot.slane %v159, %v163
    %v165 = vlaneseq
    %v166 = vshrl.u32 %v165, 7
    %v167 = vsub.s32 1, %v166
    %v168 = vrot.slane %v159, %v167
    %v269 = vunpack.c.l.b16 %v61
    %v270 = vunpack.c.h.b16 %v61
    %v271 = vunpack.c.l.b16 %v62
    %v272 = vunpack.c.h.b16 %v62
    %v273 = vunpack.c.l.b16 %v63
    %v274 = vunpack.c.h.b16 %v63
    %v275 = vunpack.c.l.b16 %v64
    %v276 = vunpack.c.h.b16 %v64
    %v277 = vunpack.c.l.b16 %v65
    %v278 = vunpack.c.h.b16 %v65
    %v279 = vunpack.c.l.b16 %v66
    %v280 = vunpack.c.h.b16 %v66
    %v281 = vunpack.c.l.b16 %v67
    %v282 = vunpack.c.h.b16 %v67
    %v283 = vunpack.c.l.b16 %v68
    %v284 = vunpack.c.h.b16 %v68
    %v285 = vunpack.c.l.b16 %v69
    %v286 = vunpack.c.h.b16 %v69
    %v287 = vunpack.c.l.b16 %v70
    %v288 = vunpack.c.h.b16 %v70
    %v289 = vunpack.c.l.b16 %v71
    %v290 = vunpack.c.h.b16 %v71
    %v291 = vunpack.c.l.b16 %v72
    %v292 = vunpack.c.h.b16 %v72
    %v293 = vunpack.c.l.b16 %v73
    %v294 = vunpack.c.h.b16 %v73
    %v295 = vunpack.c.l.b16 %v74
    %v296 = vunpack.c.h.b16 %v74
    %v297 = vunpack.c.l.b16 %v75
    %v298 = vunpack.c.h.b16 %v75
    %v299 = vunpack.c.l.b16 %v76
    %v300 = vunpack.c.h.b16 %v76
    %v301 = vunpack.c.l.b16 %v77
    %v302 = vunpack.c.h.b16 %v77
    %v303 = vunpack.c.l.b16 %v78
    %v304 = vunpack.c.h.b16 %v78
    %v305 = vunpack.c.l.b16 %v79
    %v306 = vunpack.c.h.b16 %v79
    %v307 = vunpack.c.l.b16 %v80
    %v308 = vunpack.c.h.b16 %v80
    %v309 = vunpack.c.l.b16 %v81
    %v310 = vunpack.c.h.b16 %v81
    %v311 = vunpack.c.l.b16 %v82
    %v312 = vunpack.c.h.b16 %v82
    %v313 = vunpack.c.l.b16 %v83
    %v314 = vunpack.c.h.b16 %v83
    %v315 = vunpack.c.l.b16 %v84
    %v316 = vunpack.c.h.b16 %v84
    %v317 = vunpack.c.l.b16 %v85
    %v318 = vunpack.c.h.b16 %v85
    %v319 = vunpack.c.l.b16 %v86
    %v320 = vunpack.c.h.b16 %v86
    %v321 = vunpack.c.l.b16 %v87
    %v322 = vunpack.c.h.b16 %v87
    %v323 = vunpack.c.l.b16 %v88
    %v324 = vunpack.c.h.b16 %v88
    %v325 = vunpack.c.l.b16 %v89
    %v326 = vunpack.c.h.b16 %v89
    %v327 = vunpack.c.l.b16 %v90
    %v328 = vunpack.c.h.b16 %v90
    %v329 = vunpack.c.l.b16 %v91
    %v330 = vunpack.c.h.b16 %v91
    %v331 = vunpack.c.l.b16 %v92
    %v332 = vunpack.c.h.b16 %v92
    %v333 = vunpack.c.l.b16 %v93
    %v334 = vunpack.c.h.b16 %v93
    %v335 = vunpack.c.l.b16 %v94
    %v336 = vunpack.c.h.b16 %v94
    %v337 = vunpack.c.l.b16 %v95
    %v338 = vunpack.c.h.b16 %v95
    %v339 = vunpack.c.l.b16 %v96
    %v340 = vunpack.c.h.b16 %v96
    %v341 = vunpack.c.l.b16 %v97
    %v342 = vunpack.c.h.b16 %v97
    %v343 = vunpack.c.l.b16 %v98
    %v344 = vunpack.c.h.b16 %v98
    %v345 = vunpack.c.l.b16 %v99
    %v346 = vunpack.c.h.b16 %v99
    %v347 = vunpack.c.l.b16 %v100
    %v348 = vunpack.c.h.b16 %v100
    %v349 = vunpack.c.l.b16 %v101
    %v350 = vunpack.c.h.b16 %v101
    %v351 = vunpack.c.l.b16 %v102
    %v352 = vunpack.c.h.b16 %v102
    %v353 = vunpack.c.l.b16 %v103
    %v354 = vunpack.c.h.b16 %v103
    %v355 = vunpack.c.l.b16 %v104
    %v356 = vunpack.c.h.b16 %v104
    %v357 = vunpack.c.l.b16 %v105
    %v358 = vunpack.c.h.b16 %v105
    %v359 = vunpack.c.l.b16 %v106
    %v360 = vunpack.c.h.b16 %v106
    %v361 = vunpack.c.l.b16 %v107
    %v362 = vunpack.c.h.b16 %v107
    %v363 = vunpack.c.l.b16 %v108
    %v364 = vunpack.c.h.b16 %v108
    %v365 = vunpack.c.l.b16 %v109
    %v366 = vunpack.c.h.b16 %v109
    %v367 = vunpack.c.l.b16 %v110
    %v368 = vunpack.c.h.b16 %v110
    %v369 = vunpack.c.l.b16 %v111
    %v370 = vunpack.c.h.b16 %v111
    %v371 = vunpack.c.l.b16 %v112
    %v372 = vunpack.c.h.b16 %v112
    %v373 = vunpack.c.l.b16 %v113
    %v374 = vunpack.c.h.b16 %v113
    %v375 = vunpack.c.l.b16 %v114
    %v376 = vunpack.c.h.b16 %v114
    %v377 = vunpack.c.l.b16 %v115
    %v378 = vunpack.c.h.b16 %v115
    %v379 = vunpack.c.l.b16 %v116
    %v380 = vunpack.c.h.b16 %v116
    %v381 = vunpack.c.l.b16 %v117
    %v382 = vunpack.c.h.b16 %v117
    %v383 = vunpack.c.l.b16 %v118
    %v384 = vunpack.c.h.b16 %v118
    %v385 = vunpack.c.l.b16 %v119
    %v386 = vunpack.c.h.b16 %v119
    %v387 = vunpack.c.l.b16 %v120
    %v388 = vunpack.c.h.b16 %v120
    %v389 = vunpack.c.l.b16 %v121
    %v390 = vunpack.c.h.b16 %v121
    %v391 = vunpack.c.l.b16 %v122
    %v392 = vunpack.c.h.b16 %v122
    %v393 = vunpack.c.l.b16 %v123
    %v394 = vunpack.c.h.b16 %v123
    %v395 = vunpack.c.l.b16 %v124
    %v396 = vunpack.c.h.b16 %v124
    %v397 = vunpack.c.l.b16 %v125
    %v398 = vunpack.c.h.b16 %v125
    %v399 = vunpack.c.l.b16 %v126
    %v400 = vunpack.c.h.b16 %v126
    %v401 = vunpack.c.l.b16 %v127
    %v402 = vunpack.c.h.b16 %v127
    %v403 = vunpack.c.l.b16 %v128
    %v404 = vunpack.c.h.b16 %v128
    %v405 = vunpack.c.l.b16 %v129
    %v406 = vunpack.c.h.b16 %v129
    %v407 = vunpack.c.l.b16 %v130
    %v408 = vunpack.c.h.b16 %v130
    %v409 = vunpack.c.l.b16 %v131
    %v410 = vunpack.c.h.b16 %v131
    %v411 = vunpack.c.l.b16 %v132
    %v412 = vunpack.c.h.b16 %v132
    %v413 = vunpack.c.l.b16 %v133
    %v414 = vunpack.c.h.b16 %v133
    %v415 = vunpack.c.l.b16 %v134
    %v416 = vunpack.c.h.b16 %v134
    %v417 = vunpack.c.l.b16 %v135
    %v418 = vunpack.c.h.b16 %v135
    %v419 = vunpack.c.l.b16 %v136
    %v420 = vunpack.c.h.b16 %v136
    %v421 = vunpack.c.l.b16 %v137
    %v422 = vunpack.c.h.b16 %v137
    %v423 = vunpack.c.l.b16 %v138
    %v424 = vunpack.c.h.b16 %v138
    %v425 = vunpack.c.l.b16 %v139
    %v426 = vunpack.c.h.b16 %v139
    %v427 = vunpack.c.l.b16 %v140
    %v428 = vunpack.c.h.b16 %v140
    %v429 = vunpack.c.l.b16 %v141
    %v430 = vunpack.c.h.b16 %v141
    %v431 = vunpack.c.l.b16 %v142
    %v432 = vunpack.c.h.b16 %v142
    %v433 = vunpack.c.l.b16 %v143
    %v434 = vunpack.c.h.b16 %v143
    %v435 = vunpack.c.l.b16 %v144
    %v436 = vunpack.c.h.b16 %v144
    %v437 = vunpack.c.l.b16 %v145
    %v438 = vunpack.c.h.b16 %v145
    %v439 = vunpack.c.l.b16 %v146
    %v440 = vunpack.c.h.b16 %v146
    %v441 = vunpack.c.l.b16 %v147
    %v442 = vunpack.c.h.b16 %v147
    %v443 = vunpack.c.l.b16 %v148
    %v444 = vunpack.c.h.b16 %v148
    %v445 = vunpack.c.l.b16 %v149
    %v446 = vunpack.c.h.b16 %v149
    %v447 = vunpack.c.l.b16 %v150
    %v448 = vunpack.c.h.b16 %v150
    %v449 = vunpack.c.l.b16 %v151
    %v450 = vunpack.c.h.b16 %v151
    %v451 = vunpack.c.l.b16 %v152
    %v452 = vunpack.c.h.b16 %v152
    %v453 = vunpack.c.l.b16 %v153
    %v454 = vunpack.c.h.b16 %v153
    %v455 = vunpack.c.l.b16 %v154
    %v456 = vunpack.c.h.b16 %v154
    %v457 = vunpack.c.l.b16 %v155
    %v458 = vunpack.c.h.b16 %v155
    %v459 = vunpack.c.l.b16 %v156
    %v460 = vunpack.c.h.b16 %v156
    %v461 = vunpack.c.l.b16 %v157
    %v462 = vunpack.c.h.b16 %v157
    %v463 = vunpack.c.l.b16 %v158
    %v464 = vunpack.c.h.b16 %v158
    %v465 = vpack.c.b16 %v271, %v269
    %v466 = vpack.c.b16 %v272, %v270
    %v467 = vpack.c.b16 %v275, %v273
    %v468 = vpack.c.b16 %v276, %v274
    %v469 = vpack.c.b16 %v279, %v277
    %v470 = vpack.c.b16 %v280, %v278
    %v471 = vpack.c.b16 %v283, %v281
    %v472 = vpack.c.b16 %v284, %v282
    %v473 = vpack.c.b16 %v287, %v285
    %v474 = vpack.c.b16 %v288, %v286
    %v475 = vpack.c.b16 %v291, %v289
    %v476 = vpack.c.b16 %v292, %v290
    %v477 = vpack.c.b16 %v295, %v293
    %v478 = vpack.c.b16 %v296, %v294
    %v479 = vpack.c.b16 %v299, %v297
    %v480 = vpack.c.b16 %v300, %v298
    %v481 = vpack.c.b16 %v303, %v301
    %v482 = vpack.c.b16 %v304, %v302
    %v483 = vpack.c.b16 %v307, %v305
    %v484 = vpack.c.b16 %v308, %v306
    %v485 = vpack.c.b16 %v311, %v309
    %v486 = vpack.c.b16 %v312, %v310
    %v487 = vpack.c.b16 %v315, %v313
    %v488 = vpack.c.b16 %v316, %v314
    %v489 = vpack.c.b16 %v319, %v317
    %v490 = vpack.c.b16 %v320, %v318
    %v491 = vpack.c.b16 %v323, %v321
    %v492 = vpack.c.b16 %v324, %v322
    %v493 = vpack.c.b16 %v327, %v325
    %v494 = vpack.c.b16 %v328, %v326
    %v495 = vpack.c.b16 %v331, %v329
    %v496 = vpack.c.b16 %v332, %v330
    %v497 = vpack.c.b16 %v335, %v333
    %v498 = vpack.c.b16 %v336, %v334
    %v499 = vpack.c.b16 %v339, %v337
    %v500 = vpack.c.b16 %v340, %v338
    %v501 = vpack.c.b16 %v343, %v341
    %v502 = vpack.c.b16 %v344, %v342
    %v503 = vpack.c.b16 %v347, %v345
    %v504 = vpack.c.b16 %v348, %v346
    %v505 = vpack.c.b16 %v351, %v349
    %v506 = vpack.c.b16 %v352, %v350
    %v507 = vpack.c.b16 %v355, %v353
    %v508 = vpack.c.b16 %v356, %v354
    %v509 = vpack.c.b16 %v359, %v357
    %v510 = vpack.c.b16 %v360, %v358
    %v511 = vpack.c.b16 %v363, %v361
    %v512 = vpack.c.b16 %v364, %v362
    %v513 = vpack.c.b16 %v367, %v365
    %v514 = vpack.c.b16 %v368, %v366
    %v515 = vpack.c.b16 %v371, %v369
    %v516 = vpack.c.b16 %v372, %v370
    %v517 = vpack.c.b16 %v375, %v373
    %v518 = vpack.c.b16 %v376, %v374
    %v519 = vpack.c.b16 %v379, %v377
    %v520 = vpack.c.b16 %v380, %v378
    %v521 = vpack.c.b16 %v383, %v381
    %v522 = vpack.c.b16 %v384, %v382
    %v523 = vpack.c.b16 %v387, %v385
    %v524 = vpack.c.b16 %v388, %v386
    %v525 = vpack.c.b16 %v391, %v389
    %v526 = vpack.c.b16 %v392, %v390
    %v527 = vpack.c.b16 %v395, %v393
    %v528 = vpack.c.b16 %v396, %v394
    %v529 = vpack.c.b16 %v399, %v397
    %v530 = vpack.c.b16 %v400, %v398
    %v531 = vpack.c.b16 %v403, %v401
    %v532 = vpack.c.b16 %v404, %v402
    %v533 = vpack.c.b16 %v407, %v405
    %v534 = vpack.c.b16 %v408, %v406
    %v535 = vpack.c.b16 %v411, %v409
    %v536 = vpack.c.b16 %v412, %v410
    %v537 = vpack.c.b16 %v415, %v413
    %v538 = vpack.c.b16 %v416, %v414
    %v539 = vpack.c.b16 %v419, %v417
    %v540 = vpack.c.b16 %v420, %v418
    %v541 = vpack.c.b16 %v423, %v421
    %v542 = vpack.c.b16 %v424, %v422
    %v543 = vpack.c.b16 %v427, %v425
    %v544 = vpack.c.b16 %v428, %v426
    %v545 = vpack.c.b16 %v431, %v429
    %v546 = vpack.c.b16 %v432, %v430
    %v547 = vpack.c.b16 %v435, %v433
    %v548 = vpack.c.b16 %v436, %v434
    %v549 = vpack.c.b16 %v439, %v437
    %v550 = vpack.c.b16 %v440, %v438
    %v551 = vpack.c.b16 %v443, %v441
    %v552 = vpack.c.b16 %v444, %v442
    %v553 = vpack.c.b16 %v447, %v445
    %v554 = vpack.c.b16 %v448, %v446
    %v555 = vpack.c.b16 %v451, %v449
    %v556 = vpack.c.b16 %v452, %v450
    %v557 = vpack.c.b16 %v455, %v453
    %v558 = vpack.c.b16 %v456, %v454
    %v559 = vpack.c.b16 %v459, %v457
    %v560 = vpack.c.b16 %v460, %v458
    %v561 = vpack.c.b16 %v463, %v461
    %v562 = vpack.c.b16 %v464, %v462
    %vm661 = vcmask 130048
    %v663 = vsel %vm661, %v60, 0
    %665 = vmatprep.subr.bf16.mxu0 %v480
    %666 = vmatpush1.bf16.msra.mxu0 %v479
    %667 = vmatprep.subr.bf16.mxu0 %v478
    %668 = vmatpush1.bf16.msra.mxu0 %v477
    %669 = vmatprep.subr.bf16.mxu0 %v476
    %670 = vmatpush1.bf16.msra.mxu0 %v475
    %671 = vmatprep.subr.bf16.mxu0 %v474
    %672 = vmatpush1.bf16.msra.mxu0 %v473
    %673 = vmatprep.subr.bf16.mxu0 %v472
    %674 = vmatpush1.bf16.msra.mxu0 %v471
    %675 = vmatprep.subr.bf16.mxu0 %v470
    %676 = vmatpush1.bf16.msra.mxu0 %v469
    %677 = vmatprep.subr.bf16.mxu0 %v468
    %678 = vmatpush1.bf16.msra.mxu0 %v467
    %679 = vmatprep.subr.bf16.mxu0 %v466
    %680 = vmatpush1.bf16.msra.mxu0 %v465
    %681 = vmatprep.subr.bf16.mxu0 %v496
    %682 = vmatpush2.bf16.msra.mxu0 %v495
    %683 = vmatprep.subr.bf16.mxu0 %v494
    %684 = vmatpush2.bf16.msra.mxu0 %v493
    %685 = vmatprep.subr.bf16.mxu0 %v492
    %686 = vmatpush2.bf16.msra.mxu0 %v491
    %687 = vmatprep.subr.bf16.mxu0 %v490
    %688 = vmatpush2.bf16.msra.mxu0 %v489
    %689 = vmatprep.subr.bf16.mxu0 %v488
    %690 = vmatpush2.bf16.msra.mxu0 %v487
    %691 = vmatprep.subr.bf16.mxu0 %v486
    %692 = vmatpush2.bf16.msra.mxu0 %v485
    %693 = vmatprep.subr.bf16.mxu0 %v484
    %694 = vmatpush2.bf16.msra.mxu0 %v483
    %695 = vmatprep.subr.bf16.mxu0 %v482
    %696 = vmatpush2.bf16.msra.mxu0 %v481
    %697 = vmatprep.mubr.bf16.mxu0 %v55
    %698 = vmatmul.mubr.bf16.gmra.mxu0 %v54
    %v699 = vpop.f32.mrf.mxu0
    %v700 = vadd.f32 %v164, %v699
    %v701 = vpop.f32.mrf.mxu0
    %v702 = vadd.f32 %v168, %v701
    %v703 = vpop.f32.mrf.mxu0
    %v704 = vadd.f32 %v164, %v703
    %v705 = vpop.f32.mrf.mxu0
    %v706 = vadd.f32 %v168, %v705
    %707 = vdwg.mxu0
    %708 = vmatprep.subr.bf16.mxu0 %v512
    %709 = vmatpush1.bf16.msra.mxu0 %v511
    %710 = vmatprep.subr.bf16.mxu0 %v510
    %711 = vmatpush1.bf16.msra.mxu0 %v509
    %712 = vmatprep.subr.bf16.mxu0 %v508
    %713 = vmatpush1.bf16.msra.mxu0 %v507
    %714 = vmatprep.subr.bf16.mxu0 %v506
    %715 = vmatpush1.bf16.msra.mxu0 %v505
    %716 = vmatprep.subr.bf16.mxu0 %v504
    %717 = vmatpush1.bf16.msra.mxu0 %v503
    %718 = vmatprep.subr.bf16.mxu0 %v502
    %719 = vmatpush1.bf16.msra.mxu0 %v501
    %720 = vmatprep.subr.bf16.mxu0 %v500
    %721 = vmatpush1.bf16.msra.mxu0 %v499
    %722 = vmatprep.subr.bf16.mxu0 %v498
    %723 = vmatpush1.bf16.msra.mxu0 %v497
    %724 = vmatprep.subr.bf16.mxu0 %v528
    %725 = vmatpush2.bf16.msra.mxu0 %v527
    %726 = vmatprep.subr.bf16.mxu0 %v526
    %727 = vmatpush2.bf16.msra.mxu0 %v525
    %728 = vmatprep.subr.bf16.mxu0 %v524
    %729 = vmatpush2.bf16.msra.mxu0 %v523
    %730 = vmatprep.subr.bf16.mxu0 %v522
    %731 = vmatpush2.bf16.msra.mxu0 %v521
    %732 = vmatprep.subr.bf16.mxu0 %v520
    %733 = vmatpush2.bf16.msra.mxu0 %v519
    %734 = vmatprep.subr.bf16.mxu0 %v518
    %735 = vmatpush2.bf16.msra.mxu0 %v517
    %736 = vmatprep.subr.bf16.mxu0 %v516
    %737 = vmatpush2.bf16.msra.mxu0 %v515
    %738 = vmatprep.subr.bf16.mxu0 %v514
    %739 = vmatpush2.bf16.msra.mxu0 %v513
    %740 = vmatprep.mubr.bf16.mxu0 %v57
    %741 = vmatmul.mubr.bf16.gmra.mxu0 %v56
    %v742 = vpop.f32.mrf.mxu0
    %v743 = vadd.f32 %v700, %v742
    %v744 = vpop.f32.mrf.mxu0
    %v745 = vadd.f32 %v702, %v744
    %v746 = vpop.f32.mrf.mxu0
    %v747 = vadd.f32 %v704, %v746
    %v748 = vpop.f32.mrf.mxu0
    %v749 = vadd.f32 %v706, %v748
    %750 = vdwg.mxu0
    %751 = vmatprep.subr.bf16.mxu0 %v544
    %752 = vmatpush1.bf16.msra.mxu0 %v543
    %753 = vmatprep.subr.bf16.mxu0 %v542
    %754 = vmatpush1.bf16.msra.mxu0 %v541
    %755 = vmatprep.subr.bf16.mxu0 %v540
    %756 = vmatpush1.bf16.msra.mxu0 %v539
    %757 = vmatprep.subr.bf16.mxu0 %v538
    %758 = vmatpush1.bf16.msra.mxu0 %v537
    %759 = vmatprep.subr.bf16.mxu0 %v536
    %760 = vmatpush1.bf16.msra.mxu0 %v535
    %761 = vmatprep.subr.bf16.mxu0 %v534
    %762 = vmatpush1.bf16.msra.mxu0 %v533
    %763 = vmatprep.subr.bf16.mxu0 %v532
    %764 = vmatpush1.bf16.msra.mxu0 %v531
    %765 = vmatprep.subr.bf16.mxu0 %v530
    %766 = vmatpush1.bf16.msra.mxu0 %v529
    %767 = vmatprep.subr.bf16.mxu0 %v560
    %768 = vmatpush2.bf16.msra.mxu0 %v559
    %769 = vmatprep.subr.bf16.mxu0 %v558
    %770 = vmatpush2.bf16.msra.mxu0 %v557
    %771 = vmatprep.subr.bf16.mxu0 %v556
    %772 = vmatpush2.bf16.msra.mxu0 %v555
    %773 = vmatprep.subr.bf16.mxu0 %v554
    %774 = vmatpush2.bf16.msra.mxu0 %v553
    %775 = vmatprep.subr.bf16.mxu0 %v552
    %776 = vmatpush2.bf16.msra.mxu0 %v551
    %777 = vmatprep.subr.bf16.mxu0 %v550
    %778 = vmatpush2.bf16.msra.mxu0 %v549
    %779 = vmatprep.subr.bf16.mxu0 %v548
    %780 = vmatpush2.bf16.msra.mxu0 %v547
    %781 = vmatprep.subr.bf16.mxu0 %v546
    %782 = vmatpush2.bf16.msra.mxu0 %v545
    %783 = vmatprep.mubr.bf16.mxu0 %v59
    %784 = vmatmul.mubr.bf16.gmra.mxu0 %v58
    %v785 = vpop.f32.mrf.mxu0
    %v786 = vadd.f32 %v743, %v785
    %v787 = vpop.f32.mrf.mxu0
    %v788 = vadd.f32 %v745, %v787
    %v789 = vpop.f32.mrf.mxu0
    %v790 = vadd.f32 %v747, %v789
    %v791 = vpop.f32.mrf.mxu0
    %v792 = vadd.f32 %v749, %v791
    %793 = vdwg.mxu0
    %794 = vmatprep.subr.bf16.mxu0 0
    %795 = vmatpush1.bf16.msra.mxu0 0
    %796 = vmatprep.subr.bf16.mxu0 0
    %797 = vmatpush1.bf16.msra.mxu0 0
    %798 = vmatprep.subr.bf16.mxu0 0
    %799 = vmatpush1.bf16.msra.mxu0 0
    %800 = vmatprep.subr.bf16.mxu0 0
    %801 = vmatpush1.bf16.msra.mxu0 0
    %802 = vmatprep.subr.bf16.mxu0 0
    %803 = vmatpush1.bf16.msra.mxu0 0
    %804 = vmatprep.subr.bf16.mxu0 0
    %805 = vmatpush1.bf16.msra.mxu0 0
    %806 = vmatprep.subr.bf16.mxu0 0
    %807 = vmatpush1.bf16.msra.mxu0 0
    %808 = vmatprep.subr.bf16.mxu0 %v562
    %809 = vmatpush1.bf16.msra.mxu0 %v561
    %810 = vmatprep.subr.bf16.mxu0 0
    %811 = vmatpush2.bf16.msra.mxu0 0
    %812 = vmatprep.subr.bf16.mxu0 0
    %813 = vmatpush2.bf16.msra.mxu0 0
    %814 = vmatprep.subr.bf16.mxu0 0
    %815 = vmatpush2.bf16.msra.mxu0 0
    %816 = vmatprep.subr.bf16.mxu0 0
    %817 = vmatpush2.bf16.msra.mxu0 0
    %818 = vmatprep.subr.bf16.mxu0 0
    %819 = vmatpush2.bf16.msra.mxu0 0
    %820 = vmatprep.subr.bf16.mxu0 0
    %821 = vmatpush2.bf16.msra.mxu0 0
    %822 = vmatprep.subr.bf16.mxu0 0
    %823 = vmatpush2.bf16.msra.mxu0 0
    %824 = vmatprep.subr.bf16.mxu0 0
    %825 = vmatpush2.bf16.msra.mxu0 0
    %826 = vmatprep.mubr.bf16.mxu0 0
    %827 = vmatmul.mubr.bf16.gmra.mxu0 %v663
    %v828 = vpop.f32.mrf.mxu0
    %v829 = vadd.f32 %v786, %v828
    %v830 = vpop.f32.mrf.mxu0
    %v831 = vadd.f32 %v788, %v830
    %v832 = vpop.f32.mrf.mxu0
    %v833 = vadd.f32 %v790, %v832
    %v834 = vpop.f32.mrf.mxu0
    %v835 = vadd.f32 %v792, %v834
    %836 = vdwg.mxu0
    %v837 = vmax.f32 %v829, 0.0
    %v838 = vmax.f32 %v831, 0.0
    %v839 = vmax.f32 %v833, 0.0
    %v840 = vmax.f32 %v835, 0.0
    %v841 = vpack.c.bf16 %v839, %v837
    %v842 = vpack.c.bf16 %v840, %v838
    %v843 = vld [vmem:[%s3] sm:$0xf]
    %v844 = vld [vmem:[%s3 + $0x4] sm:$0xf]
    %v845 = vld [vmem:[%s3 + $0x8] sm:$0xf]
    %v846 = vld [vmem:[%s3 + $0xc] sm:$0xf]
    %v847 = vld [vmem:[%s3 + $0x10] sm:$0xf]
    %v848 = vld [vmem:[%s3 + $0x14] sm:$0xf]
    %v849 = vld [vmem:[%s3 + $0x18] sm:$0xf]
    %v850 = vld [vmem:[%s3 + $0x1c] sm:$0xf]
    %v851 = vld [vmem:[%s3 + $0x20] sm:$0xf]
    %v852 = vld [vmem:[%s3 + $0x24] sm:$0xf]
    %v853 = vld [vmem:[%s3 + $0x28] sm:$0xf]
    %v854 = vld [vmem:[%s3 + $0x2c] sm:$0xf]
    %v855 = vld [vmem:[%s3 + $0x30] sm:$0xf]
    %v856 = vld [vmem:[%s3 + $0x34] sm:$0xf]
    %v857 = vld [vmem:[%s3 + $0x38] sm:$0xf]
    %v858 = vld [vmem:[%s3 + $0x3c] sm:$0xf]
    %v859 = vld [vmem:[%s3 + $0x40] sm:$0xf]
    %v860 = vld [vmem:[%s3 + $0x44] sm:$0xf]
    %v861 = vld [vmem:[%s3 + $0x48] sm:$0xf]
    %v862 = vld [vmem:[%s3 + $0x4c] sm:$0xf]
    %v863 = vld [vmem:[%s3 + $0x50] sm:$0xf]
    %v864 = vld [vmem:[%s3 + $0x54] sm:$0xf]
    %v865 = vld [vmem:[%s3 + $0x58] sm:$0xf]
    %v866 = vld [vmem:[%s3 + $0x5c] sm:$0xf]
    %v867 = vld [vmem:[%s3 + $0x60] sm:$0xf]
    %v868 = vld [vmem:[%s3 + $0x64] sm:$0xf]
    %v869 = vld [vmem:[%s3 + $0x68] sm:$0xf]
    %v870 = vld [vmem:[%s3 + $0x6c] sm:$0xf]
    %v871 = vld [vmem:[%s3 + $0x70] sm:$0xf]
    %v872 = vld [vmem:[%s3 + $0x74] sm:$0xf]
    %v873 = vld [vmem:[%s3 + $0x78] sm:$0xf]
    %v874 = vld [vmem:[%s3 + $0x7c] sm:$0xf]
    %v875 = vld [vmem:[%s4] sm:$0x1]
    %v877 = vlaneseq
    %v878 = vshrl.u32 %v877, 7
    %v879 = vsub.s32 0, %v878
    %v880 = vrot.slane %v875, %v879
    %v914 = vunpack.c.l.b16 %v843
    %v915 = vunpack.c.l.b16 %v844
    %v916 = vunpack.c.l.b16 %v845
    %v917 = vunpack.c.l.b16 %v846
    %v918 = vunpack.c.l.b16 %v847
    %v919 = vunpack.c.l.b16 %v848
    %v920 = vunpack.c.l.b16 %v849
    %v921 = vunpack.c.l.b16 %v850
    %v922 = vunpack.c.l.b16 %v851
    %v923 = vunpack.c.l.b16 %v852
    %v924 = vunpack.c.l.b16 %v853
    %v925 = vunpack.c.l.b16 %v854
    %v926 = vunpack.c.l.b16 %v855
    %v927 = vunpack.c.l.b16 %v856
    %v928 = vunpack.c.l.b16 %v857
    %v929 = vunpack.c.l.b16 %v858
    %v930 = vunpack.c.l.b16 %v859
    %v931 = vunpack.c.l.b16 %v860
    %v932 = vunpack.c.l.b16 %v861
    %v933 = vunpack.c.l.b16 %v862
    %v934 = vunpack.c.l.b16 %v863
    %v935 = vunpack.c.l.b16 %v864
    %v936 = vunpack.c.l.b16 %v865
    %v937 = vunpack.c.l.b16 %v866
    %v938 = vunpack.c.l.b16 %v867
    %v939 = vunpack.c.l.b16 %v868
    %v940 = vunpack.c.l.b16 %v869
    %v941 = vunpack.c.l.b16 %v870
    %v942 = vunpack.c.l.b16 %v871
    %v943 = vunpack.c.l.b16 %v872
    %v944 = vunpack.c.l.b16 %v873
    %v945 = vunpack.c.l.b16 %v874
    %v946 = vpack.c.b16 %v915, %v914
    %v947 = vpack.c.b16 %v917, %v916
    %v948 = vpack.c.b16 %v919, %v918
    %v949 = vpack.c.b16 %v921, %v920
    %v950 = vpack.c.b16 %v923, %v922
    %v951 = vpack.c.b16 %v925, %v924
    %v952 = vpack.c.b16 %v927, %v926
    %v953 = vpack.c.b16 %v929, %v928
    %v954 = vpack.c.b16 %v931, %v930
    %v955 = vpack.c.b16 %v933, %v932
    %v956 = vpack.c.b16 %v935, %v934
    %v957 = vpack.c.b16 %v937, %v936
    %v958 = vpack.c.b16 %v939, %v938
    %v959 = vpack.c.b16 %v941, %v940
    %v960 = vpack.c.b16 %v943, %v942
    %v961 = vpack.c.b16 %v945, %v944
    %978 = vmatprep.subr.bf16.mxu0 0
    %979 = vmatpush1.bf16.msra.mxu0 %v953
    %980 = vmatprep.subr.bf16.mxu0 0
    %981 = vmatpush1.bf16.msra.mxu0 %v952
    %982 = vmatprep.subr.bf16.mxu0 0
    %983 = vmatpush1.bf16.msra.mxu0 %v951
    %984 = vmatprep.subr.bf16.mxu0 0
    %985 = vmatpush1.bf16.msra.mxu0 %v950
    %986 = vmatprep.subr.bf16.mxu0 0
    %987 = vmatpush1.bf16.msra.mxu0 %v949
    %988 = vmatprep.subr.bf16.mxu0 0
    %989 = vmatpush1.bf16.msra.mxu0 %v948
    %990 = vmatprep.subr.bf16.mxu0 0
    %991 = vmatpush1.bf16.msra.mxu0 %v947
    %992 = vmatprep.subr.bf16.mxu0 0
    %993 = vmatpush1.bf16.msra.mxu0 %v946
    %994 = vmatprep.subr.bf16.mxu0 0
    %995 = vmatpush2.bf16.msra.mxu0 %v961
    %996 = vmatprep.subr.bf16.mxu0 0
    %997 = vmatpush2.bf16.msra.mxu0 %v960
    %998 = vmatprep.subr.bf16.mxu0 0
    %999 = vmatpush2.bf16.msra.mxu0 %v959
    %1000 = vmatprep.subr.bf16.mxu0 0
    %1001 = vmatpush2.bf16.msra.mxu0 %v958
    %1002 = vmatprep.subr.bf16.mxu0 0
    %1003 = vmatpush2.bf16.msra.mxu0 %v957
    %1004 = vmatprep.subr.bf16.mxu0 0
    %1005 = vmatpush2.bf16.msra.mxu0 %v956
    %1006 = vmatprep.subr.bf16.mxu0 0
    %1007 = vmatpush2.bf16.msra.mxu0 %v955
    %1008 = vmatprep.subr.bf16.mxu0 0
    %1009 = vmatpush2.bf16.msra.mxu0 %v954
    %1010 = vmatprep.mubr.bf16.mxu0 %v842
    %1011 = vmatmul.mubr.bf16.gmra.mxu0 %v841
    %v1012 = vpop.f32.mrf.mxu0
    %v1013 = vadd.f32 %v880, %v1012
    %v1014 = vpop.f32.mrf.mxu0
    %v1015 = vpop.f32.mrf.mxu0
    %v1016 = vadd.f32 %v880, %v1015
    %v1017 = vpop.f32.mrf.mxu0
    %1018 = vdwg.mxu0
    %v1019 = vmax.f32 %v1013, 0.0
    %v1020 = vmax.f32 %v1016, 0.0
    %v1021 = vpack.c.bf16 %v1020, %v1019
    %v1022 = vld [vmem:[%s5] sm:$0xf]
    %v1023 = vld [vmem:[%s5 + $0x4] sm:$0xf]
    %v1024 = vld [vmem:[%s5 + $0x8] sm:$0xf]
    %v1025 = vld [vmem:[%s5 + $0xc] sm:$0xf]
    %v1026 = vld [vmem:[%s5 + $0x10] sm:$0xf]
    %v1027 = vld [vmem:[%s5 + $0x14] sm:$0xf]
    %v1028 = vld [vmem:[%s5 + $0x18] sm:$0xf]
    %v1029 = vld [vmem:[%s5 + $0x1c] sm:$0xf]
    %v1030 = vld [vmem:[%s5 + $0x20] sm:$0xf]
    %v1031 = vld [vmem:[%s5 + $0x24] sm:$0xf]
    %v1032 = vld [vmem:[%s5 + $0x28] sm:$0xf]
    %v1033 = vld [vmem:[%s5 + $0x2c] sm:$0xf]
    %v1034 = vld [vmem:[%s5 + $0x30] sm:$0xf]
    %v1035 = vld [vmem:[%s5 + $0x34] sm:$0xf]
    %v1036 = vld [vmem:[%s5 + $0x38] sm:$0xf]
    %v1037 = vld [vmem:[%s5 + $0x3c] sm:$0xf]
    %v1038 = vld [vmem:[%s6] sm:$0x1]
    %v1040 = vlaneseq
    %v1041 = vshrl.u32 %v1040, 7
    %v1042 = vsub.s32 0, %v1041
    %v1043 = vrot.slane %v1038, %v1042
    %v1061 = vunpack.c.l.b16 %v1022
    %v1062 = vunpack.c.l.b16 %v1023
    %v1063 = vunpack.c.l.b16 %v1024
    %v1064 = vunpack.c.l.b16 %v1025
    %v1065 = vunpack.c.l.b16 %v1026
    %v1066 = vunpack.c.l.b16 %v1027
    %v1067 = vunpack.c.l.b16 %v1028
    %v1068 = vunpack.c.l.b16 %v1029
    %v1069 = vunpack.c.l.b16 %v1030
    %v1070 = vunpack.c.l.b16 %v1031
    %v1071 = vunpack.c.l.b16 %v1032
    %v1072 = vunpack.c.l.b16 %v1033
    %v1073 = vunpack.c.l.b16 %v1034
    %v1074 = vunpack.c.l.b16 %v1035
    %v1075 = vunpack.c.l.b16 %v1036
    %v1076 = vunpack.c.l.b16 %v1037
    %v1077 = vpack.c.b16 %v1062, %v1061
    %v1078 = vpack.c.b16 %v1064, %v1063
    %v1079 = vpack.c.b16 %v1066, %v1065
    %v1080 = vpack.c.b16 %v1068, %v1067
    %v1081 = vpack.c.b16 %v1070, %v1069
    %v1082 = vpack.c.b16 %v1072, %v1071
    %v1083 = vpack.c.b16 %v1074, %v1073
    %v1084 = vpack.c.b16 %v1076, %v1075
    %1093 = vmatprep.subr.bf16.mxu0 0
    %1094 = vmatpush1.bf16.msra.mxu0 %v1084
    %1095 = vmatprep.subr.bf16.mxu0 0
    %1096 = vmatpush1.bf16.msra.mxu0 %v1083
    %1097 = vmatprep.subr.bf16.mxu0 0
    %1098 = vmatpush1.bf16.msra.mxu0 %v1082
    %1099 = vmatprep.subr.bf16.mxu0 0
    %1100 = vmatpush1.bf16.msra.mxu0 %v1081
    %1101 = vmatprep.subr.bf16.mxu0 0
    %1102 = vmatpush1.bf16.msra.mxu0 %v1080
    %1103 = vmatprep.subr.bf16.mxu0 0
    %1104 = vmatpush1.bf16.msra.mxu0 %v1079
    %1105 = vmatprep.subr.bf16.mxu0 0
    %1106 = vmatpush1.bf16.msra.mxu0 %v1078
    %1107 = vmatprep.subr.bf16.mxu0 0
    %1108 = vmatpush1.bf16.msra.mxu0 %v1077
    %1109 = vmatprep.subr.bf16.mxu0 0
    %1110 = vmatpush2.bf16.msra.mxu0 0
    %1111 = vmatprep.subr.bf16.mxu0 0
    %1112 = vmatpush2.bf16.msra.mxu0 0
    %1113 = vmatprep.subr.bf16.mxu0 0
    %1114 = vmatpush2.bf16.msra.mxu0 0
    %1115 = vmatprep.subr.bf16.mxu0 0
    %1116 = vmatpush2.bf16.msra.mxu0 0
    %1117 = vmatprep.subr.bf16.mxu0 0
    %1118 = vmatpush2.bf16.msra.mxu0 0
    %1119 = vmatprep.subr.bf16.mxu0 0
    %1120 = vmatpush2.bf16.msra.mxu0 0
    %1121 = vmatprep.subr.bf16.mxu0 0
    %1122 = vmatpush2.bf16.msra.mxu0 0
    %1123 = vmatprep.subr.bf16.mxu0 0
    %1124 = vmatpush2.bf16.msra.mxu0 0
    %1125 = vmatprep.mubr.bf16.mxu0 0
    %1126 = vmatmul.mubr.bf16.gmra.mxu0 %v1021
    %v1127 = vpop.f32.mrf.mxu0
    %v1128 = vadd.f32 %v1043, %v1127
    %v1129 = vpop.f32.mrf.mxu0
    %v1130 = vpop.f32.mrf.mxu0
    %v1131 = vadd.f32 %v1043, %v1130
    %v1132 = vpop.f32.mrf.mxu0
    %1133 = vdwg.mxu0
    %v1134 = vmax.f32 %v1128, 0.0
    %v1135 = vmax.f32 %v1131, 0.0
    %v1136 = vpack.c.bf16 %v1135, %v1134
    %v1137 = vld [vmem:[%s7] sm:$0xff]
    %v1138 = vld [vmem:[%s7 + $0x8] sm:$0xff]
    %v1139 = vld [vmem:[%s7 + $0x10] sm:$0xff]
    %v1140 = vld [vmem:[%s7 + $0x18] sm:$0xff]
    %v1141 = vld [vmem:[%s7 + $0x20] sm:$0xff]
    %v1142 = vld [vmem:[%s7 + $0x28] sm:$0xff]
    %v1143 = vld [vmem:[%s7 + $0x30] sm:$0xff]
    %v1144 = vld [vmem:[%s7 + $0x38] sm:$0xff]
    %v1145 = vld [vmem:[%s7 + $0x40] sm:$0xff]
    %v1146 = vld [vmem:[%s7 + $0x48] sm:$0xff]
    %v1147 = vld [vmem:[%s7 + $0x50] sm:$0xff]
    %v1148 = vld [vmem:[%s7 + $0x58] sm:$0xff]
    %v1149 = vld [vmem:[%s7 + $0x60] sm:$0xff]
    %v1150 = vld [vmem:[%s7 + $0x68] sm:$0xff]
    %v1151 = vld [vmem:[%s7 + $0x70] sm:$0xff]
    %v1152 = vld [vmem:[%s7 + $0x78] sm:$0xff]
    %v1153 = vld [vmem:[%s8] sm:$0x3]
    %v1155 = vlaneseq
    %v1156 = vshrl.u32 %v1155, 7
    %v1157 = vsub.s32 0, %v1156
    %v1158 = vrot.slane %v1153, %v1157
    %v1159 = vlaneseq
    %v1160 = vshrl.u32 %v1159, 7
    %v1161 = vsub.s32 1, %v1160
    %v1162 = vrot.slane %v1153, %v1161
    %v1181 = vunpack.c.l.b16 %v1137
    %v1182 = vunpack.c.h.b16 %v1137
    %v1183 = vunpack.c.l.b16 %v1138
    %v1184 = vunpack.c.h.b16 %v1138
    %v1185 = vunpack.c.l.b16 %v1139
    %v1186 = vunpack.c.h.b16 %v1139
    %v1187 = vunpack.c.l.b16 %v1140
    %v1188 = vunpack.c.h.b16 %v1140
    %v1189 = vunpack.c.l.b16 %v1141
    %v1190 = vunpack.c.h.b16 %v1141
    %v1191 = vunpack.c.l.b16 %v1142
    %v1192 = vunpack.c.h.b16 %v1142
    %v1193 = vunpack.c.l.b16 %v1143
    %v1194 = vunpack.c.h.b16 %v1143
    %v1195 = vunpack.c.l.b16 %v1144
    %v1196 = vunpack.c.h.b16 %v1144
    %v1197 = vunpack.c.l.b16 %v1145
    %v1198 = vunpack.c.h.b16 %v1145
    %v1199 = vunpack.c.l.b16 %v1146
    %v1200 = vunpack.c.h.b16 %v1146
    %v1201 = vunpack.c.l.b16 %v1147
    %v1202 = vunpack.c.h.b16 %v1147
    %v1203 = vunpack.c.l.b16 %v1148
    %v1204 = vunpack.c.h.b16 %v1148
    %v1205 = vunpack.c.l.b16 %v1149
    %v1206 = vunpack.c.h.b16 %v1149
    %v1207 = vunpack.c.l.b16 %v1150
    %v1208 = vunpack.c.h.b16 %v1150
    %v1209 = vunpack.c.l.b16 %v1151
    %v1210 = vunpack.c.h.b16 %v1151
    %v1211 = vunpack.c.l.b16 %v1152
    %v1212 = vunpack.c.h.b16 %v1152
    %v1213 = vpack.c.b16 %v1183, %v1181
    %v1214 = vpack.c.b16 %v1184, %v1182
    %v1215 = vpack.c.b16 %v1187, %v1185
    %v1216 = vpack.c.b16 %v1188, %v1186
    %v1217 = vpack.c.b16 %v1191, %v1189
    %v1218 = vpack.c.b16 %v1192, %v1190
    %v1219 = vpack.c.b16 %v1195, %v1193
    %v1220 = vpack.c.b16 %v1196, %v1194
    %v1221 = vpack.c.b16 %v1199, %v1197
    %v1222 = vpack.c.b16 %v1200, %v1198
    %v1223 = vpack.c.b16 %v1203, %v1201
    %v1224 = vpack.c.b16 %v1204, %v1202
    %v1225 = vpack.c.b16 %v1207, %v1205
    %v1226 = vpack.c.b16 %v1208, %v1206
    %v1227 = vpack.c.b16 %v1211, %v1209
    %v1228 = vpack.c.b16 %v1212, %v1210
    %1245 = vmatprep.subr.bf16.mxu0 %v1228
    %1246 = vmatpush1.bf16.msra.mxu0 %v1227
    %1247 = vmatprep.subr.bf16.mxu0 %v1226
    %1248 = vmatpush1.bf16.msra.mxu0 %v1225
    %1249 = vmatprep.subr.bf16.mxu0 %v1224
    %1250 = vmatpush1.bf16.msra.mxu0 %v1223
    %1251 = vmatprep.subr.bf16.mxu0 %v1222
    %1252 = vmatpush1.bf16.msra.mxu0 %v1221
    %1253 = vmatprep.subr.bf16.mxu0 %v1220
    %1254 = vmatpush1.bf16.msra.mxu0 %v1219
    %1255 = vmatprep.subr.bf16.mxu0 %v1218
    %1256 = vmatpush1.bf16.msra.mxu0 %v1217
    %1257 = vmatprep.subr.bf16.mxu0 %v1216
    %1258 = vmatpush1.bf16.msra.mxu0 %v1215
    %1259 = vmatprep.subr.bf16.mxu0 %v1214
    %1260 = vmatpush1.bf16.msra.mxu0 %v1213
    %1261 = vmatprep.subr.bf16.mxu0 0
    %1262 = vmatpush2.bf16.msra.mxu0 0
    %1263 = vmatprep.subr.bf16.mxu0 0
    %1264 = vmatpush2.bf16.msra.mxu0 0
    %1265 = vmatprep.subr.bf16.mxu0 0
    %1266 = vmatpush2.bf16.msra.mxu0 0
    %1267 = vmatprep.subr.bf16.mxu0 0
    %1268 = vmatpush2.bf16.msra.mxu0 0
    %1269 = vmatprep.subr.bf16.mxu0 0
    %1270 = vmatpush2.bf16.msra.mxu0 0
    %1271 = vmatprep.subr.bf16.mxu0 0
    %1272 = vmatpush2.bf16.msra.mxu0 0
    %1273 = vmatprep.subr.bf16.mxu0 0
    %1274 = vmatpush2.bf16.msra.mxu0 0
    %1275 = vmatprep.subr.bf16.mxu0 0
    %1276 = vmatpush2.bf16.msra.mxu0 0
    %1277 = vmatprep.mubr.bf16.mxu0 0
    %1278 = vmatmul.mubr.bf16.gmra.mxu0 %v1136
    %v1279 = vpop.f32.mrf.mxu0
    %v1280 = vadd.f32 %v1158, %v1279
    %v1281 = vpop.f32.mrf.mxu0
    %v1282 = vadd.f32 %v1162, %v1281
    %v1283 = vpop.f32.mrf.mxu0
    %v1284 = vadd.f32 %v1158, %v1283
    %v1285 = vpop.f32.mrf.mxu0
    %v1286 = vadd.f32 %v1162, %v1285
    %1287 = vdwg.mxu0
    %v1288 = vmax.f32 %v1280, 0.0
    %v1289 = vmax.f32 %v1282, 0.0
    %v1290 = vmax.f32 %v1284, 0.0
    %v1291 = vmax.f32 %v1286, 0.0
    %v1292 = vpack.c.bf16 %v1290, %v1288
    %v1293 = vpack.c.bf16 %v1291, %v1289
    %v1294 = vld [vmem:[%s9] sm:$0xff]
    %v1295 = vld [vmem:[%s9 + $0x8] sm:$0xff]
    %v1296 = vld [vmem:[%s9 + $0x10] sm:$0xff]
    %v1297 = vld [vmem:[%s9 + $0x18] sm:$0xf]
    %v1298 = vld [vmem:[%s9 + $0x1c] sm:$0xff]
    %v1299 = vld [vmem:[%s9 + $0x24] sm:$0xff]
    %v1300 = vld [vmem:[%s9 + $0x2c] sm:$0xff]
    %v1301 = vld [vmem:[%s9 + $0x34] sm:$0xf]
    %v1302 = vld [vmem:[%s9 + $0x38] sm:$0xff]
    %v1303 = vld [vmem:[%s9 + $0x40] sm:$0xff]
    %v1304 = vld [vmem:[%s9 + $0x48] sm:$0xff]
    %v1305 = vld [vmem:[%s9 + $0x50] sm:$0xf]
    %v1306 = vld [vmem:[%s9 + $0x54] sm:$0xff]
    %v1307 = vld [vmem:[%s9 + $0x5c] sm:$0xff]
    %v1308 = vld [vmem:[%s9 + $0x64] sm:$0xff]
    %v1309 = vld [vmem:[%s9 + $0x6c] sm:$0xf]
    %v1310 = vld [vmem:[%s9 + $0x70] sm:$0xff]
    %v1311 = vld [vmem:[%s9 + $0x78] sm:$0xff]
    %v1312 = vld [vmem:[%s9 + $0x80] sm:$0xff]
    %v1313 = vld [vmem:[%s9 + $0x88] sm:$0xf]
    %v1314 = vld [vmem:[%s9 + $0x8c] sm:$0xff]
    %v1315 = vld [vmem:[%s9 + $0x94] sm:$0xff]
    %v1316 = vld [vmem:[%s9 + $0x9c] sm:$0xff]
    %v1317 = vld [vmem:[%s9 + $0xa4] sm:$0xf]
    %v1318 = vld [vmem:[%s9 + $0xa8] sm:$0xff]
    %v1319 = vld [vmem:[%s9 + $0xb0] sm:$0xff]
    %v1320 = vld [vmem:[%s9 + $0xb8] sm:$0xff]
    %v1321 = vld [vmem:[%s9 + $0xc0] sm:$0xf]
    %v1322 = vld [vmem:[%s9 + $0xc4] sm:$0xff]
    %v1323 = vld [vmem:[%s9 + $0xcc] sm:$0xff]
    %v1324 = vld [vmem:[%s9 + $0xd4] sm:$0xff]
    %v1325 = vld [vmem:[%s9 + $0xdc] sm:$0xf]
    %v1326 = vld [vmem:[%s9 + $0xe0] sm:$0xff]
    %v1327 = vld [vmem:[%s9 + $0xe8] sm:$0xff]
    %v1328 = vld [vmem:[%s9 + $0xf0] sm:$0xff]
    %v1329 = vld [vmem:[%s9 + $0xf8] sm:$0xf]
    %v1330 = vld [vmem:[%s9 + $0xfc] sm:$0xff]
    %v1331 = vld [vmem:[%s9 + $0x104] sm:$0xff]
    %v1332 = vld [vmem:[%s9 + $0x10c] sm:$0xff]
    %v1333 = vld [vmem:[%s9 + $0x114] sm:$0xf]
    %v1334 = vld [vmem:[%s9 + $0x118] sm:$0xff]
    %v1335 = vld [vmem:[%s9 + $0x120] sm:$0xff]
    %v1336 = vld [vmem:[%s9 + $0x128] sm:$0xff]
    %v1337 = vld [vmem:[%s9 + $0x130] sm:$0xf]
    %v1338 = vld [vmem:[%s9 + $0x134] sm:$0xff]
    %v1339 = vld [vmem:[%s9 + $0x13c] sm:$0xff]
    %v1340 = vld [vmem:[%s9 + $0x144] sm:$0xff]
    %v1341 = vld [vmem:[%s9 + $0x14c] sm:$0xf]
    %v1342 = vld [vmem:[%s9 + $0x150] sm:$0xff]
    %v1343 = vld [vmem:[%s9 + $0x158] sm:$0xff]
    %v1344 = vld [vmem:[%s9 + $0x160] sm:$0xff]
    %v1345 = vld [vmem:[%s9 + $0x168] sm:$0xf]
    %v1346 = vld [vmem:[%s9 + $0x16c] sm:$0xff]
    %v1347 = vld [vmem:[%s9 + $0x174] sm:$0xff]
    %v1348 = vld [vmem:[%s9 + $0x17c] sm:$0xff]
    %v1349 = vld [vmem:[%s9 + $0x184] sm:$0xf]
    %v1350 = vld [vmem:[%s9 + $0x188] sm:$0xff]
    %v1351 = vld [vmem:[%s9 + $0x190] sm:$0xff]
    %v1352 = vld [vmem:[%s9 + $0x198] sm:$0xff]
    %v1353 = vld [vmem:[%s9 + $0x1a0] sm:$0xf]
    %v1354 = vld [vmem:[%s9 + $0x1a4] sm:$0xff]
    %v1355 = vld [vmem:[%s9 + $0x1ac] sm:$0xff]
    %v1356 = vld [vmem:[%s9 + $0x1b4] sm:$0xff]
    %v1357 = vld [vmem:[%s9 + $0x1bc] sm:$0xf]
    %v1358 = vld [vmem:[%s9 + $0x1c0] sm:$0xff]
    %v1359 = vld [vmem:[%s9 + $0x1c8] sm:$0xff]
    %v1360 = vld [vmem:[%s9 + $0x1d0] sm:$0xff]
    %v1361 = vld [vmem:[%s9 + $0x1d8] sm:$0xf]
    %v1362 = vld [vmem:[%s9 + $0x1dc] sm:$0xff]
    %v1363 = vld [vmem:[%s9 + $0x1e4] sm:$0xff]
    %v1364 = vld [vmem:[%s9 + $0x1ec] sm:$0xff]
    %v1365 = vld [vmem:[%s9 + $0x1f4] sm:$0xf]
    %v1366 = vld [vmem:[%s9 + $0x1f8] sm:$0xff]
    %v1367 = vld [vmem:[%s9 + $0x200] sm:$0xff]
    %v1368 = vld [vmem:[%s9 + $0x208] sm:$0xff]
    %v1369 = vld [vmem:[%s9 + $0x210] sm:$0xf]
    %v1370 = vld [vmem:[%s9 + $0x214] sm:$0xff]
    %v1371 = vld [vmem:[%s9 + $0x21c] sm:$0xff]
    %v1372 = vld [vmem:[%s9 + $0x224] sm:$0xff]
    %v1373 = vld [vmem:[%s9 + $0x22c] sm:$0xf]
    %v1374 = vld [vmem:[%s9 + $0x230] sm:$0xff]
    %v1375 = vld [vmem:[%s9 + $0x238] sm:$0xff]
    %v1376 = vld [vmem:[%s9 + $0x240] sm:$0xff]
    %v1377 = vld [vmem:[%s9 + $0x248] sm:$0xf]
    %v1378 = vld [vmem:[%s9 + $0x24c] sm:$0xff]
    %v1379 = vld [vmem:[%s9 + $0x254] sm:$0xff]
    %v1380 = vld [vmem:[%s9 + $0x25c] sm:$0xff]
    %v1381 = vld [vmem:[%s9 + $0x264] sm:$0xf]
    %v1382 = vld [vmem:[%s9 + $0x268] sm:$0xff]
    %v1383 = vld [vmem:[%s9 + $0x270] sm:$0xff]
    %v1384 = vld [vmem:[%s9 + $0x278] sm:$0xff]
    %v1385 = vld [vmem:[%s9 + $0x280] sm:$0xf]
    %v1386 = vld [vmem:[%s9 + $0x284] sm:$0xff]
    %v1387 = vld [vmem:[%s9 + $0x28c] sm:$0xff]
    %v1388 = vld [vmem:[%s9 + $0x294] sm:$0xff]
    %v1389 = vld [vmem:[%s9 + $0x29c] sm:$0xf]
    %v1390 = vld [vmem:[%s9 + $0x2a0] sm:$0xff]
    %v1391 = vld [vmem:[%s9 + $0x2a8] sm:$0xff]
    %v1392 = vld [vmem:[%s9 + $0x2b0] sm:$0xff]
    %v1393 = vld [vmem:[%s9 + $0x2b8] sm:$0xf]
    %v1394 = vld [vmem:[%s9 + $0x2bc] sm:$0xff]
    %v1395 = vld [vmem:[%s9 + $0x2c4] sm:$0xff]
    %v1396 = vld [vmem:[%s9 + $0x2cc] sm:$0xff]
    %v1397 = vld [vmem:[%s9 + $0x2d4] sm:$0xf]
    %v1398 = vld [vmem:[%s9 + $0x2d8] sm:$0xff]
    %v1399 = vld [vmem:[%s9 + $0x2e0] sm:$0xff]
    %v1400 = vld [vmem:[%s9 + $0x2e8] sm:$0xff]
    %v1401 = vld [vmem:[%s9 + $0x2f0] sm:$0xf]
    %v1402 = vld [vmem:[%s9 + $0x2f4] sm:$0xff]
    %v1403 = vld [vmem:[%s9 + $0x2fc] sm:$0xff]
    %v1404 = vld [vmem:[%s9 + $0x304] sm:$0xff]
    %v1405 = vld [vmem:[%s9 + $0x30c] sm:$0xf]
    %v1406 = vld [vmem:[%s9 + $0x310] sm:$0xff]
    %v1407 = vld [vmem:[%s9 + $0x318] sm:$0xff]
    %v1408 = vld [vmem:[%s9 + $0x320] sm:$0xff]
    %v1409 = vld [vmem:[%s9 + $0x328] sm:$0xf]
    %v1410 = vld [vmem:[%s9 + $0x32c] sm:$0xff]
    %v1411 = vld [vmem:[%s9 + $0x334] sm:$0xff]
    %v1412 = vld [vmem:[%s9 + $0x33c] sm:$0xff]
    %v1413 = vld [vmem:[%s9 + $0x344] sm:$0xf]
    %v1414 = vld [vmem:[%s9 + $0x348] sm:$0xff]
    %v1415 = vld [vmem:[%s9 + $0x350] sm:$0xff]
    %v1416 = vld [vmem:[%s9 + $0x358] sm:$0xff]
    %v1417 = vld [vmem:[%s9 + $0x360] sm:$0xf]
    %v1418 = vld [vmem:[%s9 + $0x364] sm:$0xff]
    %v1419 = vld [vmem:[%s9 + $0x36c] sm:$0xff]
    %v1420 = vld [vmem:[%s9 + $0x374] sm:$0xff]
    %v1421 = vld [vmem:[%s9 + $0x37c] sm:$0xf]
    %v1422 = vld [vmem:[%s10] sm:$0x7f]
    %v1424 = vlaneseq
    %v1425 = vshrl.u32 %v1424, 7
    %v1426 = vsub.s32 0, %v1425
    %v1427 = vrot.slane %v1422, %v1426
    %v1428 = vlaneseq
    %v1429 = vshrl.u32 %v1428, 7
    %v1430 = vsub.s32 1, %v1429
    %v1431 = vrot.slane %v1422, %v1430
    %v1432 = vlaneseq
    %v1433 = vshrl.u32 %v1432, 7
    %v1434 = vsub.s32 2, %v1433
    %v1435 = vrot.slane %v1422, %v1434
    %v1436 = vlaneseq
    %v1437 = vshrl.u32 %v1436, 7
    %v1438 = vsub.s32 3, %v1437
    %v1439 = vrot.slane %v1422, %v1438
    %v1440 = vlaneseq
    %v1441 = vshrl.u32 %v1440, 7
    %v1442 = vsub.s32 4, %v1441
    %v1443 = vrot.slane %v1422, %v1442
    %v1444 = vlaneseq
    %v1445 = vshrl.u32 %v1444, 7
    %v1446 = vsub.s32 5, %v1445
    %v1447 = vrot.slane %v1422, %v1446
    %v1448 = vlaneseq
    %v1449 = vshrl.u32 %v1448, 7
    %v1450 = vsub.s32 6, %v1449
    %v1451 = vrot.slane %v1422, %v1450
    %v1587 = vunpack.c.l.b16 %v1294
    %v1588 = vunpack.c.h.b16 %v1294
    %v1589 = vunpack.c.l.b16 %v1295
    %v1590 = vunpack.c.h.b16 %v1295
    %v1591 = vunpack.c.l.b16 %v1296
    %v1592 = vunpack.c.h.b16 %v1296
    %v1593 = vunpack.c.l.b16 %v1297
    %v1594 = vunpack.c.l.b16 %v1298
    %v1595 = vunpack.c.h.b16 %v1298
    %v1596 = vunpack.c.l.b16 %v1299
    %v1597 = vunpack.c.h.b16 %v1299
    %v1598 = vunpack.c.l.b16 %v1300
    %v1599 = vunpack.c.h.b16 %v1300
    %v1600 = vunpack.c.l.b16 %v1301
    %v1601 = vunpack.c.l.b16 %v1302
    %v1602 = vunpack.c.h.b16 %v1302
    %v1603 = vunpack.c.l.b16 %v1303
    %v1604 = vunpack.c.h.b16 %v1303
    %v1605 = vunpack.c.l.b16 %v1304
    %v1606 = vunpack.c.h.b16 %v1304
    %v1607 = vunpack.c.l.b16 %v1305
    %v1608 = vunpack.c.l.b16 %v1306
    %v1609 = vunpack.c.h.b16 %v1306
    %v1610 = vunpack.c.l.b16 %v1307
    %v1611 = vunpack.c.h.b16 %v1307
    %v1612 = vunpack.c.l.b16 %v1308
    %v1613 = vunpack.c.h.b16 %v1308
    %v1614 = vunpack.c.l.b16 %v1309
    %v1615 = vunpack.c.l.b16 %v1310
    %v1616 = vunpack.c.h.b16 %v1310
    %v1617 = vunpack.c.l.b16 %v1311
    %v1618 = vunpack.c.h.b16 %v1311
    %v1619 = vunpack.c.l.b16 %v1312
    %v1620 = vunpack.c.h.b16 %v1312
    %v1621 = vunpack.c.l.b16 %v1313
    %v1622 = vunpack.c.l.b16 %v1314
    %v1623 = vunpack.c.h.b16 %v1314
    %v1624 = vunpack.c.l.b16 %v1315
    %v1625 = vunpack.c.h.b16 %v1315
    %v1626 = vunpack.c.l.b16 %v1316
    %v1627 = vunpack.c.h.b16 %v1316
    %v1628 = vunpack.c.l.b16 %v1317
    %v1629 = vunpack.c.l.b16 %v1318
    %v1630 = vunpack.c.h.b16 %v1318
    %v1631 = vunpack.c.l.b16 %v1319
    %v1632 = vunpack.c.h.b16 %v1319
    %v1633 = vunpack.c.l.b16 %v1320
    %v1634 = vunpack.c.h.b16 %v1320
    %v1635 = vunpack.c.l.b16 %v1321
    %v1636 = vunpack.c.l.b16 %v1322
    %v1637 = vunpack.c.h.b16 %v1322
    %v1638 = vunpack.c.l.b16 %v1323
    %v1639 = vunpack.c.h.b16 %v1323
    %v1640 = vunpack.c.l.b16 %v1324
    %v1641 = vunpack.c.h.b16 %v1324
    %v1642 = vunpack.c.l.b16 %v1325
    %v1643 = vunpack.c.l.b16 %v1326
    %v1644 = vunpack.c.h.b16 %v1326
    %v1645 = vunpack.c.l.b16 %v1327
    %v1646 = vunpack.c.h.b16 %v1327
    %v1647 = vunpack.c.l.b16 %v1328
    %v1648 = vunpack.c.h.b16 %v1328
    %v1649 = vunpack.c.l.b16 %v1329
    %v1650 = vunpack.c.l.b16 %v1330
    %v1651 = vunpack.c.h.b16 %v1330
    %v1652 = vunpack.c.l.b16 %v1331
    %v1653 = vunpack.c.h.b16 %v1331
    %v1654 = vunpack.c.l.b16 %v1332
    %v1655 = vunpack.c.h.b16 %v1332
    %v1656 = vunpack.c.l.b16 %v1333
    %v1657 = vunpack.c.l.b16 %v1334
    %v1658 = vunpack.c.h.b16 %v1334
    %v1659 = vunpack.c.l.b16 %v1335
    %v1660 = vunpack.c.h.b16 %v1335
    %v1661 = vunpack.c.l.b16 %v1336
    %v1662 = vunpack.c.h.b16 %v1336
    %v1663 = vunpack.c.l.b16 %v1337
    %v1664 = vunpack.c.l.b16 %v1338
    %v1665 = vunpack.c.h.b16 %v1338
    %v1666 = vunpack.c.l.b16 %v1339
    %v1667 = vunpack.c.h.b16 %v1339
    %v1668 = vunpack.c.l.b16 %v1340
    %v1669 = vunpack.c.h.b16 %v1340
    %v1670 = vunpack.c.l.b16 %v1341
    %v1671 = vunpack.c.l.b16 %v1342
    %v1672 = vunpack.c.h.b16 %v1342
    %v1673 = vunpack.c.l.b16 %v1343
    %v1674 = vunpack.c.h.b16 %v1343
    %v1675 = vunpack.c.l.b16 %v1344
    %v1676 = vunpack.c.h.b16 %v1344
    %v1677 = vunpack.c.l.b16 %v1345
    %v1678 = vunpack.c.l.b16 %v1346
    %v1679 = vunpack.c.h.b16 %v1346
    %v1680 = vunpack.c.l.b16 %v1347
    %v1681 = vunpack.c.h.b16 %v1347
    %v1682 = vunpack.c.l.b16 %v1348
    %v1683 = vunpack.c.h.b16 %v1348
    %v1684 = vunpack.c.l.b16 %v1349
    %v1685 = vunpack.c.l.b16 %v1350
    %v1686 = vunpack.c.h.b16 %v1350
    %v1687 = vunpack.c.l.b16 %v1351
    %v1688 = vunpack.c.h.b16 %v1351
    %v1689 = vunpack.c.l.b16 %v1352
    %v1690 = vunpack.c.h.b16 %v1352
    %v1691 = vunpack.c.l.b16 %v1353
    %v1692 = vunpack.c.l.b16 %v1354
    %v1693 = vunpack.c.h.b16 %v1354
    %v1694 = vunpack.c.l.b16 %v1355
    %v1695 = vunpack.c.h.b16 %v1355
    %v1696 = vunpack.c.l.b16 %v1356
    %v1697 = vunpack.c.h.b16 %v1356
    %v1698 = vunpack.c.l.b16 %v1357
    %v1699 = vunpack.c.l.b16 %v1358
    %v1700 = vunpack.c.h.b16 %v1358
    %v1701 = vunpack.c.l.b16 %v1359
    %v1702 = vunpack.c.h.b16 %v1359
    %v1703 = vunpack.c.l.b16 %v1360
    %v1704 = vunpack.c.h.b16 %v1360
    %v1705 = vunpack.c.l.b16 %v1361
    %v1706 = vunpack.c.l.b16 %v1362
    %v1707 = vunpack.c.h.b16 %v1362
    %v1708 = vunpack.c.l.b16 %v1363
    %v1709 = vunpack.c.h.b16 %v1363
    %v1710 = vunpack.c.l.b16 %v1364
    %v1711 = vunpack.c.h.b16 %v1364
    %v1712 = vunpack.c.l.b16 %v1365
    %v1713 = vunpack.c.l.b16 %v1366
    %v1714 = vunpack.c.h.b16 %v1366
    %v1715 = vunpack.c.l.b16 %v1367
    %v1716 = vunpack.c.h.b16 %v1367
    %v1717 = vunpack.c.l.b16 %v1368
    %v1718 = vunpack.c.h.b16 %v1368
    %v1719 = vunpack.c.l.b16 %v1369
    %v1720 = vunpack.c.l.b16 %v1370
    %v1721 = vunpack.c.h.b16 %v1370
    %v1722 = vunpack.c.l.b16 %v1371
    %v1723 = vunpack.c.h.b16 %v1371
    %v1724 = vunpack.c.l.b16 %v1372
    %v1725 = vunpack.c.h.b16 %v1372
    %v1726 = vunpack.c.l.b16 %v1373
    %v1727 = vunpack.c.l.b16 %v1374
    %v1728 = vunpack.c.h.b16 %v1374
    %v1729 = vunpack.c.l.b16 %v1375
    %v1730 = vunpack.c.h.b16 %v1375
    %v1731 = vunpack.c.l.b16 %v1376
    %v1732 = vunpack.c.h.b16 %v1376
    %v1733 = vunpack.c.l.b16 %v1377
    %v1734 = vunpack.c.l.b16 %v1378
    %v1735 = vunpack.c.h.b16 %v1378
    %v1736 = vunpack.c.l.b16 %v1379
    %v1737 = vunpack.c.h.b16 %v1379
    %v1738 = vunpack.c.l.b16 %v1380
    %v1739 = vunpack.c.h.b16 %v1380
    %v1740 = vunpack.c.l.b16 %v1381
    %v1741 = vunpack.c.l.b16 %v1382
    %v1742 = vunpack.c.h.b16 %v1382
    %v1743 = vunpack.c.l.b16 %v1383
    %v1744 = vunpack.c.h.b16 %v1383
    %v1745 = vunpack.c.l.b16 %v1384
    %v1746 = vunpack.c.h.b16 %v1384
    %v1747 = vunpack.c.l.b16 %v1385
    %v1748 = vunpack.c.l.b16 %v1386
    %v1749 = vunpack.c.h.b16 %v1386
    %v1750 = vunpack.c.l.b16 %v1387
    %v1751 = vunpack.c.h.b16 %v1387
    %v1752 = vunpack.c.l.b16 %v1388
    %v1753 = vunpack.c.h.b16 %v1388
    %v1754 = vunpack.c.l.b16 %v1389
    %v1755 = vunpack.c.l.b16 %v1390
    %v1756 = vunpack.c.h.b16 %v1390
    %v1757 = vunpack.c.l.b16 %v1391
    %v1758 = vunpack.c.h.b16 %v1391
    %v1759 = vunpack.c.l.b16 %v1392
    %v1760 = vunpack.c.h.b16 %v1392
    %v1761 = vunpack.c.l.b16 %v1393
    %v1762 = vunpack.c.l.b16 %v1394
    %v1763 = vunpack.c.h.b16 %v1394
    %v1764 = vunpack.c.l.b16 %v1395
    %v1765 = vunpack.c.h.b16 %v1395
    %v1766 = vunpack.c.l.b16 %v1396
    %v1767 = vunpack.c.h.b16 %v1396
    %v1768 = vunpack.c.l.b16 %v1397
    %v1769 = vunpack.c.l.b16 %v1398
    %v1770 = vunpack.c.h.b16 %v1398
    %v1771 = vunpack.c.l.b16 %v1399
    %v1772 = vunpack.c.h.b16 %v1399
    %v1773 = vunpack.c.l.b16 %v1400
    %v1774 = vunpack.c.h.b16 %v1400
    %v1775 = vunpack.c.l.b16 %v1401
    %v1776 = vunpack.c.l.b16 %v1402
    %v1777 = vunpack.c.h.b16 %v1402
    %v1778 = vunpack.c.l.b16 %v1403
    %v1779 = vunpack.c.h.b16 %v1403
    %v1780 = vunpack.c.l.b16 %v1404
    %v1781 = vunpack.c.h.b16 %v1404
    %v1782 = vunpack.c.l.b16 %v1405
    %v1783 = vunpack.c.l.b16 %v1406
    %v1784 = vunpack.c.h.b16 %v1406
    %v1785 = vunpack.c.l.b16 %v1407
    %v1786 = vunpack.c.h.b16 %v1407
    %v1787 = vunpack.c.l.b16 %v1408
    %v1788 = vunpack.c.h.b16 %v1408
    %v1789 = vunpack.c.l.b16 %v1409
    %v1790 = vunpack.c.l.b16 %v1410
    %v1791 = vunpack.c.h.b16 %v1410
    %v1792 = vunpack.c.l.b16 %v1411
    %v1793 = vunpack.c.h.b16 %v1411
    %v1794 = vunpack.c.l.b16 %v1412
    %v1795 = vunpack.c.h.b16 %v1412
    %v1796 = vunpack.c.l.b16 %v1413
    %v1797 = vunpack.c.l.b16 %v1414
    %v1798 = vunpack.c.h.b16 %v1414
    %v1799 = vunpack.c.l.b16 %v1415
    %v1800 = vunpack.c.h.b16 %v1415
    %v1801 = vunpack.c.l.b16 %v1416
    %v1802 = vunpack.c.h.b16 %v1416
    %v1803 = vunpack.c.l.b16 %v1417
    %v1804 = vunpack.c.l.b16 %v1418
    %v1805 = vunpack.c.h.b16 %v1418
    %v1806 = vunpack.c.l.b16 %v1419
    %v1807 = vunpack.c.h.b16 %v1419
    %v1808 = vunpack.c.l.b16 %v1420
    %v1809 = vunpack.c.h.b16 %v1420
    %v1810 = vunpack.c.l.b16 %v1421
    %v1811 = vpack.c.b16 %v1594, %v1587
    %v1812 = vpack.c.b16 %v1595, %v1588
    %v1813 = vpack.c.b16 %v1596, %v1589
    %v1814 = vpack.c.b16 %v1597, %v1590
    %v1815 = vpack.c.b16 %v1598, %v1591
    %v1816 = vpack.c.b16 %v1599, %v1592
    %v1817 = vpack.c.b16 %v1600, %v1593
    %v1818 = vpack.c.b16 %v1608, %v1601
    %v1819 = vpack.c.b16 %v1609, %v1602
    %v1820 = vpack.c.b16 %v1610, %v1603
    %v1821 = vpack.c.b16 %v1611, %v1604
    %v1822 = vpack.c.b16 %v1612, %v1605
    %v1823 = vpack.c.b16 %v1613, %v1606
    %v1824 = vpack.c.b16 %v1614, %v1607
    %v1825 = vpack.c.b16 %v1622, %v1615
    %v1826 = vpack.c.b16 %v1623, %v1616
    %v1827 = vpack.c.b16 %v1624, %v1617
    %v1828 = vpack.c.b16 %v1625, %v1618
    %v1829 = vpack.c.b16 %v1626, %v1619
    %v1830 = vpack.c.b16 %v1627, %v1620
    %v1831 = vpack.c.b16 %v1628, %v1621
    %v1832 = vpack.c.b16 %v1636, %v1629
    %v1833 = vpack.c.b16 %v1637, %v1630
    %v1834 = vpack.c.b16 %v1638, %v1631
    %v1835 = vpack.c.b16 %v1639, %v1632
    %v1836 = vpack.c.b16 %v1640, %v1633
    %v1837 = vpack.c.b16 %v1641, %v1634
    %v1838 = vpack.c.b16 %v1642, %v1635
    %v1839 = vpack.c.b16 %v1650, %v1643
    %v1840 = vpack.c.b16 %v1651, %v1644
    %v1841 = vpack.c.b16 %v1652, %v1645
    %v1842 = vpack.c.b16 %v1653, %v1646
    %v1843 = vpack.c.b16 %v1654, %v1647
    %v1844 = vpack.c.b16 %v1655, %v1648
    %v1845 = vpack.c.b16 %v1656, %v1649
    %v1846 = vpack.c.b16 %v1664, %v1657
    %v1847 = vpack.c.b16 %v1665, %v1658
    %v1848 = vpack.c.b16 %v1666, %v1659
    %v1849 = vpack.c.b16 %v1667, %v1660
    %v1850 = vpack.c.b16 %v1668, %v1661
    %v1851 = vpack.c.b16 %v1669, %v1662
    %v1852 = vpack.c.b16 %v1670, %v1663
    %v1853 = vpack.c.b16 %v1678, %v1671
    %v1854 = vpack.c.b16 %v1679, %v1672
    %v1855 = vpack.c.b16 %v1680, %v1673
    %v1856 = vpack.c.b16 %v1681, %v1674
    %v1857 = vpack.c.b16 %v1682, %v1675
    %v1858 = vpack.c.b16 %v1683, %v1676
    %v1859 = vpack.c.b16 %v1684, %v1677
    %v1860 = vpack.c.b16 %v1692, %v1685
    %v1861 = vpack.c.b16 %v1693, %v1686
    %v1862 = vpack.c.b16 %v1694, %v1687
    %v1863 = vpack.c.b16 %v1695, %v1688
    %v1864 = vpack.c.b16 %v1696, %v1689
    %v1865 = vpack.c.b16 %v1697, %v1690
    %v1866 = vpack.c.b16 %v1698, %v1691
    %v1867 = vpack.c.b16 %v1706, %v1699
    %v1868 = vpack.c.b16 %v1707, %v1700
    %v1869 = vpack.c.b16 %v1708, %v1701
    %v1870 = vpack.c.b16 %v1709, %v1702
    %v1871 = vpack.c.b16 %v1710, %v1703
    %v1872 = vpack.c.b16 %v1711, %v1704
    %v1873 = vpack.c.b16 %v1712, %v1705
    %v1874 = vpack.c.b16 %v1720, %v1713
    %v1875 = vpack.c.b16 %v1721, %v1714
    %v1876 = vpack.c.b16 %v1722, %v1715
    %v1877 = vpack.c.b16 %v1723, %v1716
    %v1878 = vpack.c.b16 %v1724, %v1717
    %v1879 = vpack.c.b16 %v1725, %v1718
    %v1880 = vpack.c.b16 %v1726, %v1719
    %v1881 = vpack.c.b16 %v1734, %v1727
    %v1882 = vpack.c.b16 %v1735, %v1728
    %v1883 = vpack.c.b16 %v1736, %v1729
    %v1884 = vpack.c.b16 %v1737, %v1730
    %v1885 = vpack.c.b16 %v1738, %v1731
    %v1886 = vpack.c.b16 %v1739, %v1732
    %v1887 = vpack.c.b16 %v1740, %v1733
    %v1888 = vpack.c.b16 %v1748, %v1741
    %v1889 = vpack.c.b16 %v1749, %v1742
    %v1890 = vpack.c.b16 %v1750, %v1743
    %v1891 = vpack.c.b16 %v1751, %v1744
    %v1892 = vpack.c.b16 %v1752, %v1745
    %v1893 = vpack.c.b16 %v1753, %v1746
    %v1894 = vpack.c.b16 %v1754, %v1747
    %v1895 = vpack.c.b16 %v1762, %v1755
    %v1896 = vpack.c.b16 %v1763, %v1756
    %v1897 = vpack.c.b16 %v1764, %v1757
    %v1898 = vpack.c.b16 %v1765, %v1758
    %v1899 = vpack.c.b16 %v1766, %v1759
    %v1900 = vpack.c.b16 %v1767, %v1760
    %v1901 = vpack.c.b16 %v1768, %v1761
    %v1902 = vpack.c.b16 %v1776, %v1769
    %v1903 = vpack.c.b16 %v1777, %v1770
    %v1904 = vpack.c.b16 %v1778, %v1771
    %v1905 = vpack.c.b16 %v1779, %v1772
    %v1906 = vpack.c.b16 %v1780, %v1773
    %v1907 = vpack.c.b16 %v1781, %v1774
    %v1908 = vpack.c.b16 %v1782, %v1775
    %v1909 = vpack.c.b16 %v1790, %v1783
    %v1910 = vpack.c.b16 %v1791, %v1784
    %v1911 = vpack.c.b16 %v1792, %v1785
    %v1912 = vpack.c.b16 %v1793, %v1786
    %v1913 = vpack.c.b16 %v1794, %v1787
    %v1914 = vpack.c.b16 %v1795, %v1788
    %v1915 = vpack.c.b16 %v1796, %v1789
    %v1916 = vpack.c.b16 %v1804, %v1797
    %v1917 = vpack.c.b16 %v1805, %v1798
    %v1918 = vpack.c.b16 %v1806, %v1799
    %v1919 = vpack.c.b16 %v1807, %v1800
    %v1920 = vpack.c.b16 %v1808, %v1801
    %v1921 = vpack.c.b16 %v1809, %v1802
    %v1922 = vpack.c.b16 %v1810, %v1803
    %2035 = vmatprep.subr.bf16.mxu0 %v1861
    %2036 = vmatpush1.bf16.msra.mxu0 %v1860
    %2037 = vmatprep.subr.bf16.mxu0 %v1854
    %2038 = vmatpush1.bf16.msra.mxu0 %v1853
    %2039 = vmatprep.subr.bf16.mxu0 %v1847
    %2040 = vmatpush1.bf16.msra.mxu0 %v1846
    %2041 = vmatprep.subr.bf16.mxu0 %v1840
    %2042 = vmatpush1.bf16.msra.mxu0 %v1839
    %2043 = vmatprep.subr.bf16.mxu0 %v1833
    %2044 = vmatpush1.bf16.msra.mxu0 %v1832
    %2045 = vmatprep.subr.bf16.mxu0 %v1826
    %2046 = vmatpush1.bf16.msra.mxu0 %v1825
    %2047 = vmatprep.subr.bf16.mxu0 %v1819
    %2048 = vmatpush1.bf16.msra.mxu0 %v1818
    %2049 = vmatprep.subr.bf16.mxu0 %v1812
    %2050 = vmatpush1.bf16.msra.mxu0 %v1811
    %2051 = vmatprep.subr.bf16.mxu0 %v1917
    %2052 = vmatpush2.bf16.msra.mxu0 %v1916
    %2053 = vmatprep.subr.bf16.mxu0 %v1910
    %2054 = vmatpush2.bf16.msra.mxu0 %v1909
    %2055 = vmatprep.subr.bf16.mxu0 %v1903
    %2056 = vmatpush2.bf16.msra.mxu0 %v1902
    %2057 = vmatprep.subr.bf16.mxu0 %v1896
    %2058 = vmatpush2.bf16.msra.mxu0 %v1895
    %2059 = vmatprep.subr.bf16.mxu0 %v1889
    %2060 = vmatpush2.bf16.msra.mxu0 %v1888
    %2061 = vmatprep.subr.bf16.mxu0 %v1882
    %2062 = vmatpush2.bf16.msra.mxu0 %v1881
    %2063 = vmatprep.subr.bf16.mxu0 %v1875
    %2064 = vmatpush2.bf16.msra.mxu0 %v1874
    %2065 = vmatprep.subr.bf16.mxu0 %v1868
    %2066 = vmatpush2.bf16.msra.mxu0 %v1867
    %2067 = vmatprep.mubr.bf16.mxu0 %v1293
    %2068 = vmatmul.mubr.bf16.gmra.mxu0 %v1292
    %v2069 = vpop.f32.mrf.mxu0
    %v2070 = vadd.f32 %v1427, %v2069
    %v2071 = vpop.f32.mrf.mxu0
    %v2072 = vadd.f32 %v1431, %v2071
    %v2073 = vpop.f32.mrf.mxu0
    %v2074 = vadd.f32 %v1427, %v2073
    %v2075 = vpop.f32.mrf.mxu0
    %v2076 = vadd.f32 %v1431, %v2075
    %2077 = vdwg.mxu0
    %2078 = vmatprep.subr.bf16.mxu0 %v1863
    %2079 = vmatpush1.bf16.msra.mxu0 %v1862
    %2080 = vmatprep.subr.bf16.mxu0 %v1856
    %2081 = vmatpush1.bf16.msra.mxu0 %v1855
    %2082 = vmatprep.subr.bf16.mxu0 %v1849
    %2083 = vmatpush1.bf16.msra.mxu0 %v1848
    %2084 = vmatprep.subr.bf16.mxu0 %v1842
    %2085 = vmatpush1.bf16.msra.mxu0 %v1841
    %2086 = vmatprep.subr.bf16.mxu0 %v1835
    %2087 = vmatpush1.bf16.msra.mxu0 %v1834
    %2088 = vmatprep.subr.bf16.mxu0 %v1828
    %2089 = vmatpush1.bf16.msra.mxu0 %v1827
    %2090 = vmatprep.subr.bf16.mxu0 %v1821
    %2091 = vmatpush1.bf16.msra.mxu0 %v1820
    %2092 = vmatprep.subr.bf16.mxu0 %v1814
    %2093 = vmatpush1.bf16.msra.mxu0 %v1813
    %2094 = vmatprep.subr.bf16.mxu0 %v1919
    %2095 = vmatpush2.bf16.msra.mxu0 %v1918
    %2096 = vmatprep.subr.bf16.mxu0 %v1912
    %2097 = vmatpush2.bf16.msra.mxu0 %v1911
    %2098 = vmatprep.subr.bf16.mxu0 %v1905
    %2099 = vmatpush2.bf16.msra.mxu0 %v1904
    %2100 = vmatprep.subr.bf16.mxu0 %v1898
    %2101 = vmatpush2.bf16.msra.mxu0 %v1897
    %2102 = vmatprep.subr.bf16.mxu0 %v1891
    %2103 = vmatpush2.bf16.msra.mxu0 %v1890
    %2104 = vmatprep.subr.bf16.mxu0 %v1884
    %2105 = vmatpush2.bf16.msra.mxu0 %v1883
    %2106 = vmatprep.subr.bf16.mxu0 %v1877
    %2107 = vmatpush2.bf16.msra.mxu0 %v1876
    %2108 = vmatprep.subr.bf16.mxu0 %v1870
    %2109 = vmatpush2.bf16.msra.mxu0 %v1869
    %2110 = vmatprep.mubr.bf16.mxu0 %v1293
    %2111 = vmatmul.mubr.bf16.gmra.mxu0 %v1292
    %v2112 = vpop.f32.mrf.mxu0
    %v2113 = vadd.f32 %v1435, %v2112
    %v2114 = vpop.f32.mrf.mxu0
    %v2115 = vadd.f32 %v1439, %v2114
    %v2116 = vpop.f32.mrf.mxu0
    %v2117 = vadd.f32 %v1435, %v2116
    %v2118 = vpop.f32.mrf.mxu0
    %v2119 = vadd.f32 %v1439, %v2118
    %2120 = vdwg.mxu0
    %2121 = vmatprep.subr.bf16.mxu0 %v1865
    %2122 = vmatpush1.bf16.msra.mxu0 %v1864
    %2123 = vmatprep.subr.bf16.mxu0 %v1858
    %2124 = vmatpush1.bf16.msra.mxu0 %v1857
    %2125 = vmatprep.subr.bf16.mxu0 %v1851
    %2126 = vmatpush1.bf16.msra.mxu0 %v1850
    %2127 = vmatprep.subr.bf16.mxu0 %v1844
    %2128 = vmatpush1.bf16.msra.mxu0 %v1843
    %2129 = vmatprep.subr.bf16.mxu0 %v1837
    %2130 = vmatpush1.bf16.msra.mxu0 %v1836
    %2131 = vmatprep.subr.bf16.mxu0 %v1830
    %2132 = vmatpush1.bf16.msra.mxu0 %v1829
    %2133 = vmatprep.subr.bf16.mxu0 %v1823
    %2134 = vmatpush1.bf16.msra.mxu0 %v1822
    %2135 = vmatprep.subr.bf16.mxu0 %v1816
    %2136 = vmatpush1.bf16.msra.mxu0 %v1815
    %2137 = vmatprep.subr.bf16.mxu0 %v1921
    %2138 = vmatpush2.bf16.msra.mxu0 %v1920
    %2139 = vmatprep.subr.bf16.mxu0 %v1914
    %2140 = vmatpush2.bf16.msra.mxu0 %v1913
    %2141 = vmatprep.subr.bf16.mxu0 %v1907
    %2142 = vmatpush2.bf16.msra.mxu0 %v1906
    %2143 = vmatprep.subr.bf16.mxu0 %v1900
    %2144 = vmatpush2.bf16.msra.mxu0 %v1899
    %2145 = vmatprep.subr.bf16.mxu0 %v1893
    %2146 = vmatpush2.bf16.msra.mxu0 %v1892
    %2147 = vmatprep.subr.bf16.mxu0 %v1886
    %2148 = vmatpush2.bf16.msra.mxu0 %v1885
    %2149 = vmatprep.subr.bf16.mxu0 %v1879
    %2150 = vmatpush2.bf16.msra.mxu0 %v1878
    %2151 = vmatprep.subr.bf16.mxu0 %v1872
    %2152 = vmatpush2.bf16.msra.mxu0 %v1871
    %2153 = vmatprep.mubr.bf16.mxu0 %v1293
    %2154 = vmatmul.mubr.bf16.gmra.mxu0 %v1292
    %v2155 = vpop.f32.mrf.mxu0
    %v2156 = vadd.f32 %v1443, %v2155
    %v2157 = vpop.f32.mrf.mxu0
    %v2158 = vadd.f32 %v1447, %v2157
    %v2159 = vpop.f32.mrf.mxu0
    %v2160 = vadd.f32 %v1443, %v2159
    %v2161 = vpop.f32.mrf.mxu0
    %v2162 = vadd.f32 %v1447, %v2161
    %2163 = vdwg.mxu0
    %2164 = vmatprep.subr.bf16.mxu0 0
    %2165 = vmatpush1.bf16.msra.mxu0 %v1866
    %2166 = vmatprep.subr.bf16.mxu0 0
    %2167 = vmatpush1.bf16.msra.mxu0 %v1859
    %2168 = vmatprep.subr.bf16.mxu0 0
    %2169 = vmatpush1.bf16.msra.mxu0 %v1852
    %2170 = vmatprep.subr.bf16.mxu0 0
    %2171 = vmatpush1.bf16.msra.mxu0 %v1845
    %2172 = vmatprep.subr.bf16.mxu0 0
    %2173 = vmatpush1.bf16.msra.mxu0 %v1838
    %2174 = vmatprep.subr.bf16.mxu0 0
    %2175 = vmatpush1.bf16.msra.mxu0 %v1831
    %2176 = vmatprep.subr.bf16.mxu0 0
    %2177 = vmatpush1.bf16.msra.mxu0 %v1824
    %2178 = vmatprep.subr.bf16.mxu0 0
    %2179 = vmatpush1.bf16.msra.mxu0 %v1817
    %2180 = vmatprep.subr.bf16.mxu0 0
    %2181 = vmatpush2.bf16.msra.mxu0 %v1922
    %2182 = vmatprep.subr.bf16.mxu0 0
    %2183 = vmatpush2.bf16.msra.mxu0 %v1915
    %2184 = vmatprep.subr.bf16.mxu0 0
    %2185 = vmatpush2.bf16.msra.mxu0 %v1908
    %2186 = vmatprep.subr.bf16.mxu0 0
    %2187 = vmatpush2.bf16.msra.mxu0 %v1901
    %2188 = vmatprep.subr.bf16.mxu0 0
    %2189 = vmatpush2.bf16.msra.mxu0 %v1894
    %2190 = vmatprep.subr.bf16.mxu0 0
    %2191 = vmatpush2.bf16.msra.mxu0 %v1887
    %2192 = vmatprep.subr.bf16.mxu0 0
    %2193 = vmatpush2.bf16.msra.mxu0 %v1880
    %2194 = vmatprep.subr.bf16.mxu0 0
    %2195 = vmatpush2.bf16.msra.mxu0 %v1873
    %2196 = vmatprep.mubr.bf16.mxu0 %v1293
    %2197 = vmatmul.mubr.bf16.gmra.mxu0 %v1292
    %v2198 = vpop.f32.mrf.mxu0
    %v2199 = vadd.f32 %v1451, %v2198
    %v2200 = vpop.f32.mrf.mxu0
    %v2201 = vpop.f32.mrf.mxu0
    %v2202 = vadd.f32 %v1451, %v2201
    %v2203 = vpop.f32.mrf.mxu0
    %2204 = vdwg.mxu0
    %v2205 = vmul.f32 %v2070, 0.5
    %v2206 = vmul.f32 %v2072, 0.5
    %v2207 = vmul.f32 %v2113, 0.5
    %v2208 = vmul.f32 %v2115, 0.5
    %v2209 = vmul.f32 %v2156, 0.5
    %v2210 = vmul.f32 %v2158, 0.5
    %v2211 = vmul.f32 %v2199, 0.5
    %v2212 = vmul.f32 %v2074, 0.5
    %v2213 = vmul.f32 %v2076, 0.5
    %v2214 = vmul.f32 %v2117, 0.5
    %v2215 = vmul.f32 %v2119, 0.5
    %v2216 = vmul.f32 %v2160, 0.5
    %v2217 = vmul.f32 %v2162, 0.5
    %v2218 = vmul.f32 %v2202, 0.5
    %v2219 = vtanh.pop %v2205
    %v2220 = vtanh.pop %v2206
    %v2221 = vtanh.pop %v2207
    %v2222 = vtanh.pop %v2208
    %v2223 = vtanh.pop %v2209
    %v2224 = vtanh.pop %v2210
    %v2225 = vtanh.pop %v2211
    %v2226 = vtanh.pop %v2212
    %v2227 = vtanh.pop %v2213
    %v2228 = vtanh.pop %v2214
    %v2229 = vtanh.pop %v2215
    %v2230 = vtanh.pop %v2216
    %v2231 = vtanh.pop %v2217
    %v2232 = vtanh.pop %v2218
    %v2233 = vadd.f32 %v2219, 1.0
    %v2234 = vadd.f32 %v2220, 1.0
    %v2235 = vadd.f32 %v2221, 1.0
    %v2236 = vadd.f32 %v2222, 1.0
    %v2237 = vadd.f32 %v2223, 1.0
    %v2238 = vadd.f32 %v2224, 1.0
    %v2239 = vadd.f32 %v2225, 1.0
    %v2240 = vadd.f32 %v2226, 1.0
    %v2241 = vadd.f32 %v2227, 1.0
    %v2242 = vadd.f32 %v2228, 1.0
    %v2243 = vadd.f32 %v2229, 1.0
    %v2244 = vadd.f32 %v2230, 1.0
    %v2245 = vadd.f32 %v2231, 1.0
    %v2246 = vadd.f32 %v2232, 1.0
    %v2247 = vmul.f32 %v2233, 0.5
    %v2248 = vmul.f32 %v2234, 0.5
    %v2249 = vmul.f32 %v2235, 0.5
    %v2250 = vmul.f32 %v2236, 0.5
    %v2251 = vmul.f32 %v2237, 0.5
    %v2252 = vmul.f32 %v2238, 0.5
    %v2253 = vmul.f32 %v2239, 0.5
    %v2254 = vmul.f32 %v2240, 0.5
    %v2255 = vmul.f32 %v2241, 0.5
    %v2256 = vmul.f32 %v2242, 0.5
    %v2257 = vmul.f32 %v2243, 0.5
    %v2258 = vmul.f32 %v2244, 0.5
    %v2259 = vmul.f32 %v2245, 0.5
    %v2260 = vmul.f32 %v2246, 0.5
    %v2261 = vpack.c.bf16 %v2254, %v2247
    %v2262 = vpack.c.bf16 %v2255, %v2248
    %v2263 = vpack.c.bf16 %v2256, %v2249
    %v2264 = vpack.c.bf16 %v2257, %v2250
    %v2265 = vpack.c.bf16 %v2258, %v2251
    %v2266 = vpack.c.bf16 %v2259, %v2252
    %v2267 = vpack.c.bf16 %v2260, %v2253
    %v2275 = vunpack.c.l.b16 %v2261
    %v2276 = vunpack.c.l.b16 %v2262
    %v2277 = vunpack.c.l.b16 %v2263
    %v2278 = vunpack.c.l.b16 %v2264
    %v2279 = vunpack.c.l.b16 %v2265
    %v2280 = vunpack.c.l.b16 %v2266
    %v2281 = vunpack.c.l.b16 %v2267
    %v2282 = vunpack.c.h.b16 %v2261
    %v2283 = vunpack.c.h.b16 %v2262
    %v2284 = vunpack.c.h.b16 %v2263
    %v2285 = vunpack.c.h.b16 %v2264
    %v2286 = vunpack.c.h.b16 %v2265
    %v2287 = vunpack.c.h.b16 %v2266
    %v2288 = vunpack.c.h.b16 %v2267
    %v2289 = vpack.c.b16 %v2276, %v2275
    %v2290 = vpack.c.b16 %v2278, %v2277
    %v2291 = vpack.c.b16 %v2280, %v2279
    %v2292 = vpack.c.b16 %v2281, %v2281
    %v2293 = vpack.c.b16 %v2283, %v2282
    %v2294 = vpack.c.b16 %v2285, %v2284
    %v2295 = vpack.c.b16 %v2287, %v2286
    %v2296 = vpack.c.b16 %v2288, %v2288
    %2305 = vst [vmem:[#allocation2] sm:$0xff] %v2289
    %2306 = vst [vmem:[#allocation2 + $0x8] sm:$0xff] %v2290
    %2307 = vst [vmem:[#allocation2 + $0x10] sm:$0xff] %v2291
    %vm2308 = vcmask 125952
    %2309 = vst.msk [vmem:[#allocation2 + $0x18] sm:$0xf] %vm2308, %v2292
    %2310 = vst [vmem:[#allocation2 + $0x1c] sm:$0xff] %v2293
    %2311 = vst [vmem:[#allocation2 + $0x24] sm:$0xff] %v2294
    %2312 = vst [vmem:[#allocation2 + $0x2c] sm:$0xff] %v2295
    %2313 = vst.msk [vmem:[#allocation2 + $0x34] sm:$0xf] %vm2308, %v2296
    // Predicated region
    $region46: #{tpu_custom_call.1} parent=1 // pred_check
      _
    $region47: #{tpu_custom_call.1} parent=1 // pred_check_branch
      %2315 = sbr.rel (0) target = $region49
    $region48: #{tpu_custom_call.1} parent=1 // pred_region
      %s2317 = ssub.s32 896, 896
      %2318 = vsyncadd [#allocation3], %s2317
      %s2319 = sshll.u32 [#allocation2], 4
      %s2320 = int_to_ptr.vmem [resolvable:$true] %s2319
      %2325 = dma.vmem_to_hbm [thread:$0]  %s2320, 896, %s11, [#allocation3], 448, 448, 28
    $region49: #{tpu_custom_call.1} parent=1 // pred_fallthru
      _
    // Predicated region
    $region50: #{tpu_custom_call.1} parent=1 // pred_check
      _
    $region51: #{tpu_custom_call.1} parent=1 // pred_check_branch
      %2327 = sbr.rel (0) target = $region53
    $region52: #{tpu_custom_call.1} parent=1 // pred_region
      %2328 = dma.done [#allocation3], 896
    $region53: #{tpu_custom_call.1} parent=1 // pred_fallthru
      _
    %2329 = vsyncpa [#allocation3], 1

</llo_original>
